<compile_context>
chip_gen: v6e
topology: v6e:2x2x1
jax: 0.10.0
libtpu: 0.0.40
codegen_flags: <defaults>
</compile_context>

<pallas_src>
import jax
import jax.numpy as jnp
from jax import lax
from jax.experimental import pallas as pl
from jax.experimental.pallas import tpu as pltpu

LANE = 128     # lane width (last dim of a vreg tile)
SUBLANE = 8    # sublane width (second-to-last dim of a vreg tile)


def _round_up(n, m):
    return ((n + m - 1) // m) * m


def _vmem_capacity_bytes():
    try:
        return int(pltpu.get_tpu_info().vmem_capacity_bytes)
    except Exception:
        return 64 << 20          # conservative (v7x-sized) fallback


def _num_tensorcores():
    try:
        kind = jax.devices()[0].device_kind.lower()
    except Exception:
        return 1
    # v7x (and v4 / v5p megacore) expose two TensorCores behind one device.
    if "7" in kind or "v4" in kind or "v5p" in kind:
        return 2
    return 1


def _choose_batch_tiling(batch):
    bp = _round_up(max(batch, 1), SUBLANE)
    nb = 1
    # Split the batch across two TensorCores only when each half still fills the MXU
    # (>= ~256 rows per tile); otherwise one full-batch tile keeps the recurrence
    # throughput-bound instead of MXU-latency-bound.
    if _num_tensorcores() >= 2 and bp >= 512:
        nb = 2
    b_tile = _round_up(-(-bp // nb), SUBLANE)
    return nb, b_tile, nb * b_tile


def _choose_t_chunk(seq_len, b_tile, hp, requested):
    if requested is not None:
        return max(1, min(int(requested), seq_len))
    # Target >= 256 rows in the hoisted per-chunk projection (fills v6e/v7x's 256-wide MXU),
    # keep at least 8 steps per chunk to amortize per-grid-step overhead, cap at 64.
    t = min(64, max(8, -(-256 // b_tile)))
    t = min(t, seq_len)
    # Keep the per-chunk f32 activation slabs (input double-buffer + 2 scratch) modest.
    while t > 1 and 4 * t * b_tile * hp * 4 > (24 << 20):
        t = (t + 1) // 2
    return max(1, t)


def _plan_layer_groups(n_layers, hp, w_itemsize, act_bytes):
    """Greedily pack layers into groups whose resident weights fit in VMEM."""
    cap = _vmem_capacity_bytes()
    budget = max(cap - (12 << 20) - act_bytes - (16 << 20), 4 << 20)
    groups, cur, cur_bytes = [], [], 0
    for l in range(n_layers):
        # layer 0's input projection lives in XLA, so it only keeps W_hh resident.
        lw = hp * hp * w_itemsize if l == 0 else 2 * hp * hp * w_itemsize + hp * 4
        if cur and cur_bytes + lw > budget:
            groups.append(cur)
            cur, cur_bytes = [], 0
        cur.append(l)
        cur_bytes += lw
    groups.append(cur)
    return groups


# ---------------------------------------------------------------------------
# Fused kernel over a group of RNN layers.
#
#   h_t^l = relu( x_t^l @ W_ih^l.T + (b_ih^l + b_hh^l) + h_{t-1}^l @ W_hh^l.T )
#
# Grid = (batch_tiles, time_chunks).  Each grid step sees one (t_chunk*b_tile, H) block of
# the group's input slab (rows ordered (time, batch-in-tile)).  Per layer: the input
# projection for the whole chunk is ONE tall MXU matmul; the serial loop over the chunk's
# timesteps only does h @ W_hh^T + P[t] and a ReLU, writing per-step activations into a
# VMEM staging buffer for the next layer.  Hidden states persist in VMEM scratch across
# time chunks.  The last group fuses the final Linear on the last valid timestep's state.
# ---------------------------------------------------------------------------
def _make_group_kernel(n_layers, t_chunk, b_tile, first_group, last_group,
                       seq_len, ragged, unroll):
    def kernel(*refs):
        it = iter(refs)
        x_ref = next(it)
        layer_refs = []
        for l in range(n_layers):
            if l == 0 and first_group:
                layer_refs.append((None, next(it), None))        # only W_hh^T
            else:
                layer_refs.append((next(it), next(it), next(it)))  # W_ih^T, W_hh^T, bias
        if last_group:
            wfc_ref = next(it)
            bfc_ref = next(it)
        out_ref = next(it)
        p_ref = next(it)        # (tb, hp) f32: hoisted per-chunk input projection
        act_ref = next(it)      # (tb, hp) f32: staged per-step activations (layer -> layer)
        h_ref = next(it)        # (n_layers, b_tile, hp) f32: hidden-state carries

        t_blk = pl.program_id(1)
        n_tchunks = pl.num_programs(1)
        t_base = t_blk * t_chunk

        @pl.when(t_blk == 0)
        def _():
            # h0 = 0 per batch tile (matches torch.zeros initial hidden state).
            h_ref[...] = jnp.zeros_like(h_ref)
            if last_group:
                # Defensive: the fc output block is revisited across the time axis and only
                # written at the last chunk; zero it so a writeback-every-iteration compiler
                # could never store garbage.
                out_ref[...] = jnp.zeros_like(out_ref)

        h_last = None
        for l in range(n_layers):
            wih_ref, whh_ref, bias_ref = layer_refs[l]
            whh = whh_ref[...]
            cdt = whh.dtype          # MXU operand dtype (bf16 in the optimized path)

            if l == 0 and first_group:
                # Layer-0 projection was hoisted to one XLA GEMM: the chunk input already
                # IS the per-step additive term P.
                src_ref = x_ref
            else:
                # Hoisted input projection for the whole chunk: one tall MXU matmul
                # (t_chunk*b_tile, H) x (H, H); bias broadcast once per chunk.
                prev = x_ref[...] if l == 0 else act_ref[...]
                p_ref[...] = (
                    jnp.dot(prev.astype(cdt), wih_ref[...],
                            preferred_element_type=jnp.float32)
                    + bias_ref[...]
                )
                src_ref = p_ref

            write_act = (l < n_layers - 1) or (not last_group)

            def step(i, h, whh=whh, cdt=cdt, src_ref=src_ref, write_act=write_act):
                row = pl.multiple_of(i * b_tile, b_tile)
                pre = (
                    jnp.dot(h.astype(cdt), whh, preferred_element_type=jnp.float32)
                    + src_ref[pl.ds(row, b_tile), :]
                )
                h_new = jnp.maximum(pre, 0.0)            # nonlinearity='relu'
                if ragged:
                    # Zero-padded timesteps (final chunk only) keep the carried state.
                    h_new = jnp.where(t_base + i < seq_len, h_new, h)
                if write_act:
                    act_ref[pl.ds(row, b_tile), :] = h_new
                return h_new

            h_l = lax.fori_loop(0, t_chunk, step, h_ref[l], unroll=unroll)
            h_ref[l] = h_l
            h_last = h_l

        if last_group:
            # Fused final Linear on the last valid timestep's hidden state only.
            @pl.when(t_blk == n_tchunks - 1)
            def _():
                wfc = wfc_ref[...]
                out_ref[...] = (
                    jnp.dot(h_last.astype(wfc.dtype), wfc,
                            preferred_element_type=jnp.float32)
                    + bfc_ref[...]
                ).astype(out_ref.dtype)
        else:
            # Full-sequence output of the group's last layer: one lane-dense store.
            out_ref[...] = act_ref[...].astype(out_ref.dtype)

    return kernel


def _rnn_group_call(x_slab, layers, *, t_chunk, b_tile, seq_len, first_group,
                    last_group, fc=None, out_dtype=jnp.bfloat16):
    nb, sb, hp = x_slab.shape
    tb = t_chunk * b_tile
    assert sb % tb == 0, (sb, tb)
    nt = sb // tb
    k = len(layers)
    ragged = (nt * t_chunk != seq_len)
    unroll = t_chunk if t_chunk <= 8 else 8       # capped partial unroll (vreg pressure)

    # Resident-weight bookkeeping for VMEM sizing / buffering decisions.
    w_bytes = 0
    for (wih_t, whh_t, bias) in layers:
        w_bytes += whh_t.size * whh_t.dtype.itemsize
        if wih_t is not None:
            w_bytes += wih_t.size * wih_t.dtype.itemsize + bias.size * 4
    if last_group:
        wfc_t, bfc = fc
        op = wfc_t.shape[1]
        w_bytes += wfc_t.size * wfc_t.dtype.itemsize + bfc.size * 4
    # Single-buffer the constant-index-map resident weights once they are big enough to
    # matter (decisive inside v7x's 64 MiB VMEM); at small H the default double-buffering
    # is harmless and maximally safe.
    single_buffer_weights = w_bytes > (8 << 20)
    wbuf = 1 if single_buffer_weights else 2

    def _resident_spec(shape):
        ndim = len(shape)
        index_map = lambda b, t, _n=ndim: (0,) * _n
        if single_buffer_weights:
            try:
                return pl.BlockSpec(shape, index_map, pipeline_mode=pl.Buffered(1))
            except Exception:
                pass
        return pl.BlockSpec(shape, index_map)

    in_specs = [pl.BlockSpec((None, tb, hp), lambda b, t: (b, t, 0))]
    args = [x_slab]
    for (wih_t, whh_t, bias) in layers:
        if wih_t is None:                       # layer 0 of the model (projection in XLA)
            in_specs += [_resident_spec((hp, hp))]
            args += [whh_t]
        else:
            in_specs += [_resident_spec((hp, hp)), _resident_spec((hp, hp)),
                         _resident_spec((1, hp))]
            args += [wih_t, whh_t, bias]

    if last_group:
        in_specs += [_resident_spec((hp, op)), _resident_spec((1, op))]
        args += [wfc_t, bfc]
        out_shape = jax.ShapeDtypeStruct((nb * b_tile, op), jnp.float32)
        out_specs = pl.BlockSpec((b_tile, op), lambda b, t: (b, 0))
        out_block_bytes = 2 * b_tile * op * 4
    else:
        out_shape = jax.ShapeDtypeStruct((nb, sb, hp), out_dtype)
        out_specs = pl.BlockSpec((None, tb, hp), lambda b, t: (b, t, 0))
        out_block_bytes = 2 * tb * hp * jnp.dtype(out_dtype).itemsize

    # Generation-aware VMEM limit: estimate actual use, allow up to capacity - headroom
    # (~116 MiB on v5e/v6e's 128 MiB VMEM, ~52 MiB on v7x's 64 MiB).
    x_bytes = jnp.dtype(x_slab.dtype).itemsize
    est = (2 * tb * hp * x_bytes                 # pipelined input chunk (double-buffered)
           + wbuf * w_bytes                      # resident weights / biases
           + out_block_bytes                     # pipelined output block
           + 2 * tb * hp * 4                     # projection + activation scratch
           + k * b_tile * hp * 4                 # hidden-state carries
           + (8 << 20))                          # headroom for compiler temporaries
    cap = _vmem_capacity_bytes()
    vmem_limit = int(min(max(est, 32 << 20), max(cap - (12 << 20), 32 << 20)))

    kernel = _make_group_kernel(k, t_chunk, b_tile, first_group, last_group,
                                seq_len, ragged, unroll)

    return pl.pallas_call(
        kernel,
        out_shape=out_shape,
        grid_spec=pltpu.PrefetchScalarGridSpec(
            num_scalar_prefetch=0,
            grid=(nb, nt),                        # (batch tiles, time chunks)
            in_specs=in_specs,
            out_specs=out_specs,
            scratch_shapes=[
                pltpu.VMEM((tb, hp), jnp.float32),        # hoisted per-chunk projection
                pltpu.VMEM((tb, hp), jnp.float32),        # staged per-step activations
                pltpu.VMEM((k, b_tile, hp), jnp.float32),  # hidden-state carry per layer
            ],
        ),
        compiler_params=pltpu.CompilerParams(
            # Batch tiles are independent (megacore-parallel); time is sequential.
            dimension_semantics=("parallel", "arbitrary"),
            vmem_limit_bytes=vmem_limit,
        ),
    )(*args)


# ---------------------------------------------------------------------------
# Parameter preparation (done once): pad H/O to 128 lanes, pre-transpose, fold the two RNN
# biases, cast MXU operands to the compute dtype.  Layer 0's input projection weights are
# kept separately (unpadded input dim) for the hoisted XLA GEMM.  Zero padding is exact:
# padded units have zero weights/bias, stay 0 through the ReLU recurrence, contribute nothing.
# ---------------------------------------------------------------------------
def prepare_params(params, *, compute_dtype=jnp.bfloat16):
    w_ih0, w_hh0, b_ih0, b_hh0 = params["rnn"][0]
    h, d_in = w_ih0.shape
    hp = _round_up(h, LANE)
    prep = {"rnn": [], "compute_dtype": compute_dtype, "hidden_padded": hp}
    prep["p0_w"] = jnp.zeros((d_in, hp), compute_dtype).at[:, :h].set(
        w_ih0.T.astype(compute_dtype))
    prep["p0_b"] = jnp.zeros((hp,), jnp.float32).at[:h].set(b_ih0 + b_hh0)
    for li, (w_ih, w_hh, b_ih, b_hh) in enumerate(params["rnn"]):
        whh_t = jnp.zeros((hp, hp), compute_dtype).at[:h, :h].set(
            w_hh.T.astype(compute_dtype))
        if li == 0:
            prep["rnn"].append((None, whh_t, None))
        else:
            wih_t = jnp.zeros((hp, hp), compute_dtype).at[:h, :h].set(
                w_ih.T.astype(compute_dtype))
            bias = jnp.zeros((1, hp), jnp.float32).at[0, :h].set(b_ih + b_hh)
            prep["rnn"].append((wih_t, whh_t, bias))
    o, h2 = params["fc_w"].shape
    op = _round_up(o, LANE)
    prep["fc_w_t"] = jnp.zeros((hp, op), compute_dtype).at[:h2, :o].set(
        params["fc_w"].T.astype(compute_dtype))
    prep["fc_b"] = jnp.zeros((1, op), jnp.float32).at[0, :o].set(params["fc_b"])
    prep["output_dim"] = o
    return prep


# ---------------------------------------------------------------------------
# Full model forward (layout plumbing + layer-0 projection in XLA, everything else Pallas)
# ---------------------------------------------------------------------------
def rnn_model_forward(x_bsd, prep, *, t_chunk=None):
    """x_bsd: (batch, seq, input_dim) — PyTorch batch_first layout.  Returns (batch, out)."""
    B, S, D = x_bsd.shape
    cdt = prep["compute_dtype"]
    hp = prep["hidden_padded"]
    n_layers = len(prep["rnn"])

    nb, b_tile, bp = _choose_batch_tiling(B)
    t_chunk = _choose_t_chunk(S, b_tile, hp, t_chunk)
    nt = -(-S // t_chunk)
    s_pad = nt * t_chunk
    tb = t_chunk * b_tile

    # Layer-0 input projection hoisted to ONE XLA GEMM over the raw (unpadded) input dim.
    prec = lax.Precision.HIGHEST if jnp.dtype(cdt) == jnp.dtype(jnp.float32) else None
    p0 = jnp.dot(x_bsd.reshape(B * S, D).astype(cdt), prep["p0_w"],
                 preferred_element_type=jnp.float32, precision=prec)
    p0 = p0.reshape(B, S, hp) + prep["p0_b"]
    # Slab layout (nb, s_pad*b_tile, hp): per batch tile, rows ordered (time, batch-in-tile);
    # zero-padded in batch (sublanes) and time (ragged last chunk, masked in-kernel).
    p0 = jnp.transpose(p0, (1, 0, 2))
    p0 = jnp.pad(p0, ((0, s_pad - S), (0, bp - B), (0, 0)))
    p0 = p0.reshape(s_pad, nb, b_tile, hp).transpose(1, 0, 2, 3).reshape(
        nb, s_pad * b_tile, hp)

    w_itemsize = jnp.dtype(cdt).itemsize
    groups = _plan_layer_groups(n_layers, hp, w_itemsize, act_bytes=6 * tb * hp * 4)

    slab = p0
    out = None
    for gi, group in enumerate(groups):
        first_group = gi == 0
        last_group = gi == len(groups) - 1
        layers = [prep["rnn"][l] for l in group]
        res = _rnn_group_call(
            slab, layers, t_chunk=t_chunk, b_tile=b_tile, seq_len=S,
            first_group=first_group, last_group=last_group,
            fc=(prep["fc_w_t"], prep["fc_b"]) if last_group else None,
            out_dtype=cdt)
        if last_group:
            out = res
        else:
            slab = res
    return out[:B, :prep["output_dim"]]


# ---------------------------------------------------------------------------
# Deterministic parameter init (shapes follow nn.RNN / nn.Linear; PyTorch-style
# uniform(-1/sqrt(hidden), 1/sqrt(hidden)))
# ---------------------------------------------------------------------------
def init_params(key, input_dim, hidden_dim, layer_dim, output_dim):
    k = 1.0 / jnp.sqrt(jnp.float32(hidden_dim))
    params = {"rnn": []}
    for layer in range(layer_dim):
        d_in = input_dim if layer == 0 else hidden_dim
        key, k1, k2, k3, k4 = jax.random.split(key, 5)
        w_ih = jax.random.uniform(k1, (hidden_dim, d_in), jnp.float32, -k, k)
        w_hh = jax.random.uniform(k2, (hidden_dim, hidden_dim), jnp.float32, -k, k)
        b_ih = jax.random.uniform(k3, (hidden_dim,), jnp.float32, -k, k)
        b_hh = jax.random.uniform(k4, (hidden_dim,), jnp.float32, -k, k)
        params["rnn"].append((w_ih, w_hh, b_ih, b_hh))
    key, k5, k6 = jax.random.split(key, 3)
    params["fc_w"] = jax.random.uniform(k5, (output_dim, hidden_dim), jnp.float32, -k, k)
    params["fc_b"] = jax.random.uniform(k6, (output_dim,), jnp.float32, -k, k)
    return params


# Pure-JAX reference (mirrors torch.nn.RNN semantics) for the correctness check.
def reference_forward(x_bsd, params):
    B, S, _ = x_bsd.shape
    seq_in = x_bsd
    for (w_ih, w_hh, b_ih, b_hh) in params["rnn"]:
        H = w_hh.shape[0]
        h = jnp.zeros((B, H), jnp.float32)
        outs = []
        for t in range(S):
            h = jnp.maximum(seq_in[:, t, :] @ w_ih.T + b_ih + h @ w_hh.T + b_hh, 0.0)
            outs.append(h)
        seq_in = jnp.stack(outs, axis=1)
    return seq_in[:, -1, :] @ params["fc_w"].T + params["fc_b"]


if __name__ == "__main__":
    batch, seq, input_dim, hidden_dim, layer_dim, output_dim = 2, 8, 4, 32, 2, 3

    key = jax.random.PRNGKey(0)
    key, xkey = jax.random.split(key)
    x = jax.random.normal(xkey, (batch, seq, input_dim), jnp.float32)
    params = init_params(key, input_dim, hidden_dim, layer_dim, output_dim)
    ref = jax.block_until_ready(reference_forward(x, params))

    # f32 compute path: strict structural check against the pure-JAX reference.
    prep_f32 = prepare_params(params, compute_dtype=jnp.float32)
    out_f32 = jax.block_until_ready(rnn_model_forward(x, prep_f32))
    assert out_f32.shape == (batch, output_dim), out_f32.shape
    assert jnp.allclose(out_f32, ref, atol=2e-4, rtol=2e-4), (out_f32, ref)

    # Ragged-time path (t_chunk does not divide S): exercises padding + in-kernel masking
    # and the hidden-state carry across time chunks.
    out_f32_ragged = jax.block_until_ready(rnn_model_forward(x, prep_f32, t_chunk=5))
    assert jnp.allclose(out_f32_ragged, ref, atol=2e-4, rtol=2e-4), (out_f32_ragged, ref)

    # bf16-MXU path (the optimized configuration): loose tolerance for bf16 operands.
    prep_bf16 = prepare_params(params, compute_dtype=jnp.bfloat16)
    out_bf16 = jax.block_until_ready(rnn_model_forward(x, prep_bf16))
    assert out_bf16.shape == (batch, output_dim), out_bf16.shape
    assert jnp.allclose(out_bf16, ref, atol=1e-1, rtol=1e-1), (out_bf16, ref)

    print("KERNEL_OK")
</pallas_src>

<mosaic_0001>
module attributes {stable_mosaic.version = 11 : i64} {
  func.func @kernel(%arg0: i32, %arg1: i32, %arg2: memref<1x64x128xf32, #tpu.memory_space<vmem>>, %arg3: memref<128x128xf32, #tpu.memory_space<vmem>>, %arg4: memref<128x128xf32, #tpu.memory_space<vmem>>, %arg5: memref<128x128xf32, #tpu.memory_space<vmem>>, %arg6: memref<1x128xf32, #tpu.memory_space<vmem>>, %arg7: memref<128x128xf32, #tpu.memory_space<vmem>>, %arg8: memref<1x128xf32, #tpu.memory_space<vmem>>, %arg9: memref<8x128xf32, #tpu.memory_space<vmem>>, %arg10: memref<64x128xf32, #tpu.memory_space<vmem>>, %arg11: memref<64x128xf32, #tpu.memory_space<vmem>>, %arg12: memref<2x8x128xf32, #tpu.memory_space<vmem>>) attributes {dimension_semantics = [#tpu.dimension_semantics<parallel>, #tpu.dimension_semantics<arbitrary>], iteration_bounds = array<i64: 1, 1>, scalar_prefetch = 0 : i64, scratch_operands = 3 : i64, tpu.core_type = #tpu.core_type<tc>, window_params = [{transform_indices = @transform_0, window_bounds = array<i64: 1, 64, 128>}, {pipeline_mode = #tpu.pipeline_mode<synchronous>, transform_indices = @transform_1, window_bounds = array<i64: 128, 128>}, {pipeline_mode = #tpu.pipeline_mode<synchronous>, transform_indices = @transform_2, window_bounds = array<i64: 128, 128>}, {pipeline_mode = #tpu.pipeline_mode<synchronous>, transform_indices = @transform_3, window_bounds = array<i64: 128, 128>}, {pipeline_mode = #tpu.pipeline_mode<synchronous>, transform_indices = @transform_4, window_bounds = array<i64: 1, 128>}, {pipeline_mode = #tpu.pipeline_mode<synchronous>, transform_indices = @transform_5, window_bounds = array<i64: 128, 128>}, {pipeline_mode = #tpu.pipeline_mode<synchronous>, transform_indices = @transform_6, window_bounds = array<i64: 1, 128>}, {transform_indices = @transform_7, window_bounds = array<i64: 8, 128>}]} {
    %c0_i32 = arith.constant 0 : i32
    %0 = arith.cmpi eq, %arg1, %c0_i32 : i32
    %1 = arith.extui %0 : i1 to i32
    %c0_i32_0 = arith.constant 0 : i32
    %2 = arith.cmpi ne, %1, %c0_i32_0 : i32
    scf.if %2 {
      %cst_115 = arith.constant 0.000000e+00 : f32
      %177 = vector.broadcast %cst_115 : f32 to vector<2x8x128xf32>
      %c0_116 = arith.constant 0 : index
      %c0_117 = arith.constant 0 : index
      %c0_118 = arith.constant 0 : index
      %178 = vector.load %arg12[%c0_116, %c0_117, %c0_118] : memref<2x8x128xf32, #tpu.memory_space<vmem>>, vector<2x8x128xf32>
      tpu.vector_store %arg12[%c0_116, %c0_117, %c0_118], %177 {strides = array<i32>} : memref<2x8x128xf32, #tpu.memory_space<vmem>>, vector<2x8x128xf32>,
      %cst_119 = arith.constant 0.000000e+00 : f32
      %179 = vector.broadcast %cst_119 : f32 to vector<8x128xf32>
      %c0_120 = arith.constant 0 : index
      %c0_121 = arith.constant 0 : index
      %180 = vector.load %arg9[%c0_120, %c0_121] : memref<8x128xf32, #tpu.memory_space<vmem>>, vector<8x128xf32>
      tpu.vector_store %arg9[%c0_120, %c0_121], %179 {strides = array<i32>} : memref<8x128xf32, #tpu.memory_space<vmem>>, vector<8x128xf32>,
    } else {
    }
    %c0 = arith.constant 0 : index
    %c0_1 = arith.constant 0 : index
    %3 = vector.load %arg3[%c0, %c0_1] : memref<128x128xf32, #tpu.memory_space<vmem>>, vector<128x128xf32>
    %c0_2 = arith.constant 0 : index
    %c0_3 = arith.constant 0 : index
    %c0_4 = arith.constant 0 : index
    %4 = vector.load %arg12[%c0_2, %c0_3, %c0_4] : memref<2x8x128xf32, #tpu.memory_space<vmem>>, vector<1x8x128xf32>
    %5 = vector.shape_cast %4 : vector<1x8x128xf32> to vector<8x128xf32>
    %c0_i32_5 = arith.constant 0 : i32
    %c8_i32 = arith.constant 8 : i32
    %6 = arith.muli %c0_i32_5, %c8_i32 : i32
    %7 = tpu.assume_multiple %6, 8 : i32
    %cst = arith.constant dense<0.000000e+00> : vector<8x128xf32>
    %8 = tpu.matmul %5, %3, %cst {dimension_numbers = #tpu.dot_dimension_numbers<[1], [0], [0], [1], [0, 0, 1, 1], [], []>} : vector<8x128xf32>, vector<128x128xf32>, vector<8x128xf32> -> vector<8x128xf32>
    %c0_6 = arith.constant 0 : index
    %9 = arith.index_cast %7 : i32 to index
    %c0_7 = arith.constant 0 : index
    %10 = vector.load %arg2[%c0_6, %9, %c0_7] : memref<1x64x128xf32, #tpu.memory_space<vmem>>, vector<1x8x128xf32>
    %11 = vector.shape_cast %10 : vector<1x8x128xf32> to vector<8x128xf32>
    %12 = arith.addf %8, %11 : vector<8x128xf32>
    %cst_8 = arith.constant 0.000000e+00 : f32
    %13 = vector.broadcast %cst_8 : f32 to vector<8x128xf32>
    %14 = arith.maximumf %12, %13 : vector<8x128xf32>
    %15 = arith.index_cast %7 : i32 to index
    %c0_9 = arith.constant 0 : index
    %16 = vector.load %arg11[%15, %c0_9] : memref<64x128xf32, #tpu.memory_space<vmem>>, vector<8x128xf32>
    tpu.vector_store %arg11[%15, %c0_9], %14 {strides = array<i32>} : memref<64x128xf32, #tpu.memory_space<vmem>>, vector<8x128xf32>,
    %c1_i32 = arith.constant 1 : i32
    %c8_i32_10 = arith.constant 8 : i32
    %17 = arith.muli %c1_i32, %c8_i32_10 : i32
    %18 = tpu.assume_multiple %17, 8 : i32
    %cst_11 = arith.constant dense<0.000000e+00> : vector<8x128xf32>
    %19 = tpu.matmul %14, %3, %cst_11 {dimension_numbers = #tpu.dot_dimension_numbers<[1], [0], [0], [1], [0, 0, 1, 1], [], []>} : vector<8x128xf32>, vector<128x128xf32>, vector<8x128xf32> -> vector<8x128xf32>
    %c0_12 = arith.constant 0 : index
    %20 = arith.index_cast %18 : i32 to index
    %c0_13 = arith.constant 0 : index
    %21 = vector.load %arg2[%c0_12, %20, %c0_13] : memref<1x64x128xf32, #tpu.memory_space<vmem>>, vector<1x8x128xf32>
    %22 = vector.shape_cast %21 : vector<1x8x128xf32> to vector<8x128xf32>
    %23 = arith.addf %19, %22 : vector<8x128xf32>
    %cst_14 = arith.constant 0.000000e+00 : f32
    %24 = vector.broadcast %cst_14 : f32 to vector<8x128xf32>
    %25 = arith.maximumf %23, %24 : vector<8x128xf32>
    %26 = arith.index_cast %18 : i32 to index
    %c0_15 = arith.constant 0 : index
    %27 = vector.load %arg11[%26, %c0_15] : memref<64x128xf32, #tpu.memory_space<vmem>>, vector<8x128xf32>
    tpu.vector_store %arg11[%26, %c0_15], %25 {strides = array<i32>} : memref<64x128xf32, #tpu.memory_space<vmem>>, vector<8x128xf32>,
    %c2_i32 = arith.constant 2 : i32
    %c8_i32_16 = arith.constant 8 : i32
    %28 = arith.muli %c2_i32, %c8_i32_16 : i32
    %29 = tpu.assume_multiple %28, 8 : i32
    %cst_17 = arith.constant dense<0.000000e+00> : vector<8x128xf32>
    %30 = tpu.matmul %25, %3, %cst_17 {dimension_numbers = #tpu.dot_dimension_numbers<[1], [0], [0], [1], [0, 0, 1, 1], [], []>} : vector<8x128xf32>, vector<128x128xf32>, vector<8x128xf32> -> vector<8x128xf32>
    %c0_18 = arith.constant 0 : index
    %31 = arith.index_cast %29 : i32 to index
    %c0_19 = arith.constant 0 : index
    %32 = vector.load %arg2[%c0_18, %31, %c0_19] : memref<1x64x128xf32, #tpu.memory_space<vmem>>, vector<1x8x128xf32>
    %33 = vector.shape_cast %32 : vector<1x8x128xf32> to vector<8x128xf32>
    %34 = arith.addf %30, %33 : vector<8x128xf32>
    %cst_20 = arith.constant 0.000000e+00 : f32
    %35 = vector.broadcast %cst_20 : f32 to vector<8x128xf32>
    %36 = arith.maximumf %34, %35 : vector<8x128xf32>
    %37 = arith.index_cast %29 : i32 to index
    %c0_21 = arith.constant 0 : index
    %38 = vector.load %arg11[%37, %c0_21] : memref<64x128xf32, #tpu.memory_space<vmem>>, vector<8x128xf32>
    tpu.vector_store %arg11[%37, %c0_21], %36 {strides = array<i32>} : memref<64x128xf32, #tpu.memory_space<vmem>>, vector<8x128xf32>,
    %c3_i32 = arith.constant 3 : i32
    %c8_i32_22 = arith.constant 8 : i32
    %39 = arith.muli %c3_i32, %c8_i32_22 : i32
    %40 = tpu.assume_multiple %39, 8 : i32
    %cst_23 = arith.constant dense<0.000000e+00> : vector<8x128xf32>
    %41 = tpu.matmul %36, %3, %cst_23 {dimension_numbers = #tpu.dot_dimension_numbers<[1], [0], [0], [1], [0, 0, 1, 1], [], []>} : vector<8x128xf32>, vector<128x128xf32>, vector<8x128xf32> -> vector<8x128xf32>
    %c0_24 = arith.constant 0 : index
    %42 = arith.index_cast %40 : i32 to index
    %c0_25 = arith.constant 0 : index
    %43 = vector.load %arg2[%c0_24, %42, %c0_25] : memref<1x64x128xf32, #tpu.memory_space<vmem>>, vector<1x8x128xf32>
    %44 = vector.shape_cast %43 : vector<1x8x128xf32> to vector<8x128xf32>
    %45 = arith.addf %41, %44 : vector<8x128xf32>
    %cst_26 = arith.constant 0.000000e+00 : f32
    %46 = vector.broadcast %cst_26 : f32 to vector<8x128xf32>
    %47 = arith.maximumf %45, %46 : vector<8x128xf32>
    %48 = arith.index_cast %40 : i32 to index
    %c0_27 = arith.constant 0 : index
    %49 = vector.load %arg11[%48, %c0_27] : memref<64x128xf32, #tpu.memory_space<vmem>>, vector<8x128xf32>
    tpu.vector_store %arg11[%48, %c0_27], %47 {strides = array<i32>} : memref<64x128xf32, #tpu.memory_space<vmem>>, vector<8x128xf32>,
    %c4_i32 = arith.constant 4 : i32
    %c8_i32_28 = arith.constant 8 : i32
    %50 = arith.muli %c4_i32, %c8_i32_28 : i32
    %51 = tpu.assume_multiple %50, 8 : i32
    %cst_29 = arith.constant dense<0.000000e+00> : vector<8x128xf32>
    %52 = tpu.matmul %47, %3, %cst_29 {dimension_numbers = #tpu.dot_dimension_numbers<[1], [0], [0], [1], [0, 0, 1, 1], [], []>} : vector<8x128xf32>, vector<128x128xf32>, vector<8x128xf32> -> vector<8x128xf32>
    %c0_30 = arith.constant 0 : index
    %53 = arith.index_cast %51 : i32 to index
    %c0_31 = arith.constant 0 : index
    %54 = vector.load %arg2[%c0_30, %53, %c0_31] : memref<1x64x128xf32, #tpu.memory_space<vmem>>, vector<1x8x128xf32>
    %55 = vector.shape_cast %54 : vector<1x8x128xf32> to vector<8x128xf32>
    %56 = arith.addf %52, %55 : vector<8x128xf32>
    %cst_32 = arith.constant 0.000000e+00 : f32
    %57 = vector.broadcast %cst_32 : f32 to vector<8x128xf32>
    %58 = arith.maximumf %56, %57 : vector<8x128xf32>
    %59 = arith.index_cast %51 : i32 to index
    %c0_33 = arith.constant 0 : index
    %60 = vector.load %arg11[%59, %c0_33] : memref<64x128xf32, #tpu.memory_space<vmem>>, vector<8x128xf32>
    tpu.vector_store %arg11[%59, %c0_33], %58 {strides = array<i32>} : memref<64x128xf32, #tpu.memory_space<vmem>>, vector<8x128xf32>,
    %c5_i32 = arith.constant 5 : i32
    %c8_i32_34 = arith.constant 8 : i32
    %61 = arith.muli %c5_i32, %c8_i32_34 : i32
    %62 = tpu.assume_multiple %61, 8 : i32
    %cst_35 = arith.constant dense<0.000000e+00> : vector<8x128xf32>
    %63 = tpu.matmul %58, %3, %cst_35 {dimension_numbers = #tpu.dot_dimension_numbers<[1], [0], [0], [1], [0, 0, 1, 1], [], []>} : vector<8x128xf32>, vector<128x128xf32>, vector<8x128xf32> -> vector<8x128xf32>
    %c0_36 = arith.constant 0 : index
    %64 = arith.index_cast %62 : i32 to index
    %c0_37 = arith.constant 0 : index
    %65 = vector.load %arg2[%c0_36, %64, %c0_37] : memref<1x64x128xf32, #tpu.memory_space<vmem>>, vector<1x8x128xf32>
    %66 = vector.shape_cast %65 : vector<1x8x128xf32> to vector<8x128xf32>
    %67 = arith.addf %63, %66 : vector<8x128xf32>
    %cst_38 = arith.constant 0.000000e+00 : f32
    %68 = vector.broadcast %cst_38 : f32 to vector<8x128xf32>
    %69 = arith.maximumf %67, %68 : vector<8x128xf32>
    %70 = arith.index_cast %62 : i32 to index
    %c0_39 = arith.constant 0 : index
    %71 = vector.load %arg11[%70, %c0_39] : memref<64x128xf32, #tpu.memory_space<vmem>>, vector<8x128xf32>
    tpu.vector_store %arg11[%70, %c0_39], %69 {strides = array<i32>} : memref<64x128xf32, #tpu.memory_space<vmem>>, vector<8x128xf32>,
    %c6_i32 = arith.constant 6 : i32
    %c8_i32_40 = arith.constant 8 : i32
    %72 = arith.muli %c6_i32, %c8_i32_40 : i32
    %73 = tpu.assume_multiple %72, 8 : i32
    %cst_41 = arith.constant dense<0.000000e+00> : vector<8x128xf32>
    %74 = tpu.matmul %69, %3, %cst_41 {dimension_numbers = #tpu.dot_dimension_numbers<[1], [0], [0], [1], [0, 0, 1, 1], [], []>} : vector<8x128xf32>, vector<128x128xf32>, vector<8x128xf32> -> vector<8x128xf32>
    %c0_42 = arith.constant 0 : index
    %75 = arith.index_cast %73 : i32 to index
    %c0_43 = arith.constant 0 : index
    %76 = vector.load %arg2[%c0_42, %75, %c0_43] : memref<1x64x128xf32, #tpu.memory_space<vmem>>, vector<1x8x128xf32>
    %77 = vector.shape_cast %76 : vector<1x8x128xf32> to vector<8x128xf32>
    %78 = arith.addf %74, %77 : vector<8x128xf32>
    %cst_44 = arith.constant 0.000000e+00 : f32
    %79 = vector.broadcast %cst_44 : f32 to vector<8x128xf32>
    %80 = arith.maximumf %78, %79 : vector<8x128xf32>
    %81 = arith.index_cast %73 : i32 to index
    %c0_45 = arith.constant 0 : index
    %82 = vector.load %arg11[%81, %c0_45] : memref<64x128xf32, #tpu.memory_space<vmem>>, vector<8x128xf32>
    tpu.vector_store %arg11[%81, %c0_45], %80 {strides = array<i32>} : memref<64x128xf32, #tpu.memory_space<vmem>>, vector<8x128xf32>,
    %c7_i32 = arith.constant 7 : i32
    %c8_i32_46 = arith.constant 8 : i32
    %83 = arith.muli %c7_i32, %c8_i32_46 : i32
    %84 = tpu.assume_multiple %83, 8 : i32
    %cst_47 = arith.constant dense<0.000000e+00> : vector<8x128xf32>
    %85 = tpu.matmul %80, %3, %cst_47 {dimension_numbers = #tpu.dot_dimension_numbers<[1], [0], [0], [1], [0, 0, 1, 1], [], []>} : vector<8x128xf32>, vector<128x128xf32>, vector<8x128xf32> -> vector<8x128xf32>
    %c0_48 = arith.constant 0 : index
    %86 = arith.index_cast %84 : i32 to index
    %c0_49 = arith.constant 0 : index
    %87 = vector.load %arg2[%c0_48, %86, %c0_49] : memref<1x64x128xf32, #tpu.memory_space<vmem>>, vector<1x8x128xf32>
    %88 = vector.shape_cast %87 : vector<1x8x128xf32> to vector<8x128xf32>
    %89 = arith.addf %85, %88 : vector<8x128xf32>
    %cst_50 = arith.constant 0.000000e+00 : f32
    %90 = vector.broadcast %cst_50 : f32 to vector<8x128xf32>
    %91 = arith.maximumf %89, %90 : vector<8x128xf32>
    %92 = arith.index_cast %84 : i32 to index
    %c0_51 = arith.constant 0 : index
    %93 = vector.load %arg11[%92, %c0_51] : memref<64x128xf32, #tpu.memory_space<vmem>>, vector<8x128xf32>
    tpu.vector_store %arg11[%92, %c0_51], %91 {strides = array<i32>} : memref<64x128xf32, #tpu.memory_space<vmem>>, vector<8x128xf32>,
    %c8_i32_52 = arith.constant 8 : i32
    %c0_53 = arith.constant 0 : index
    %c0_54 = arith.constant 0 : index
    %c0_55 = arith.constant 0 : index
    %94 = vector.load %arg12[%c0_53, %c0_54, %c0_55] : memref<2x8x128xf32, #tpu.memory_space<vmem>>, vector<1x8x128xf32>
    %95 = vector.shape_cast %94 : vector<1x8x128xf32> to vector<8x128xf32>
    %96 = vector.shape_cast %91 : vector<8x128xf32> to vector<1x8x128xf32>
    tpu.vector_store %arg12[%c0_53, %c0_54, %c0_55], %96 {strides = array<i32>} : memref<2x8x128xf32, #tpu.memory_space<vmem>>, vector<1x8x128xf32>,
    %c0_56 = arith.constant 0 : index
    %c0_57 = arith.constant 0 : index
    %97 = vector.load %arg5[%c0_56, %c0_57] : memref<128x128xf32, #tpu.memory_space<vmem>>, vector<128x128xf32>
    %c0_58 = arith.constant 0 : index
    %c0_59 = arith.constant 0 : index
    %98 = vector.load %arg11[%c0_58, %c0_59] : memref<64x128xf32, #tpu.memory_space<vmem>>, vector<64x128xf32>
    %c0_60 = arith.constant 0 : index
    %c0_61 = arith.constant 0 : index
    %99 = vector.load %arg4[%c0_60, %c0_61] : memref<128x128xf32, #tpu.memory_space<vmem>>, vector<128x128xf32>
    %cst_62 = arith.constant dense<0.000000e+00> : vector<64x128xf32>
    %100 = tpu.matmul %98, %99, %cst_62 {dimension_numbers = #tpu.dot_dimension_numbers<[1], [0], [0], [1], [0, 0, 1, 1], [], []>} : vector<64x128xf32>, vector<128x128xf32>, vector<64x128xf32> -> vector<64x128xf32>
    %c0_63 = arith.constant 0 : index
    %c0_64 = arith.constant 0 : index
    %101 = vector.load %arg6[%c0_63, %c0_64] : memref<1x128xf32, #tpu.memory_space<vmem>>, vector<1x128xf32>
    %102 = vector.broadcast %101 : vector<1x128xf32> to vector<64x128xf32>
    %103 = arith.addf %100, %102 : vector<64x128xf32>
    %c0_65 = arith.constant 0 : index
    %c0_66 = arith.constant 0 : index
    %104 = vector.load %arg10[%c0_65, %c0_66] : memref<64x128xf32, #tpu.memory_space<vmem>>, vector<64x128xf32>
    tpu.vector_store %arg10[%c0_65, %c0_66], %103 {strides = array<i32>} : memref<64x128xf32, #tpu.memory_space<vmem>>, vector<64x128xf32>,
    %c1 = arith.constant 1 : index
    %c0_67 = arith.constant 0 : index
    %c0_68 = arith.constant 0 : index
    %105 = vector.load %arg12[%c1, %c0_67, %c0_68] : memref<2x8x128xf32, #tpu.memory_space<vmem>>, vector<1x8x128xf32>
    %106 = vector.shape_cast %105 : vector<1x8x128xf32> to vector<8x128xf32>
    %c0_i32_69 = arith.constant 0 : i32
    %c8_i32_70 = arith.constant 8 : i32
    %107 = arith.muli %c0_i32_69, %c8_i32_70 : i32
    %108 = tpu.assume_multiple %107, 8 : i32
    %cst_71 = arith.constant dense<0.000000e+00> : vector<8x128xf32>
    %109 = tpu.matmul %106, %97, %cst_71 {dimension_numbers = #tpu.dot_dimension_numbers<[1], [0], [0], [1], [0, 0, 1, 1], [], []>} : vector<8x128xf32>, vector<128x128xf32>, vector<8x128xf32> -> vector<8x128xf32>
    %110 = arith.index_cast %108 : i32 to index
    %c0_72 = arith.constant 0 : index
    %111 = vector.load %arg10[%110, %c0_72] : memref<64x128xf32, #tpu.memory_space<vmem>>, vector<8x128xf32>
    %112 = arith.addf %109, %111 : vector<8x128xf32>
    %cst_73 = arith.constant 0.000000e+00 : f32
    %113 = vector.broadcast %cst_73 : f32 to vector<8x128xf32>
    %114 = arith.maximumf %112, %113 : vector<8x128xf32>
    %c1_i32_74 = arith.constant 1 : i32
    %c8_i32_75 = arith.constant 8 : i32
    %115 = arith.muli %c1_i32_74, %c8_i32_75 : i32
    %116 = tpu.assume_multiple %115, 8 : i32
    %cst_76 = arith.constant dense<0.000000e+00> : vector<8x128xf32>
    %117 = tpu.matmul %114, %97, %cst_76 {dimension_numbers = #tpu.dot_dimension_numbers<[1], [0], [0], [1], [0, 0, 1, 1], [], []>} : vector<8x128xf32>, vector<128x128xf32>, vector<8x128xf32> -> vector<8x128xf32>
    %118 = arith.index_cast %116 : i32 to index
    %c0_77 = arith.constant 0 : index
    %119 = vector.load %arg10[%118, %c0_77] : memref<64x128xf32, #tpu.memory_space<vmem>>, vector<8x128xf32>
    %120 = arith.addf %117, %119 : vector<8x128xf32>
    %cst_78 = arith.constant 0.000000e+00 : f32
    %121 = vector.broadcast %cst_78 : f32 to vector<8x128xf32>
    %122 = arith.maximumf %120, %121 : vector<8x128xf32>
    %c2_i32_79 = arith.constant 2 : i32
    %c8_i32_80 = arith.constant 8 : i32
    %123 = arith.muli %c2_i32_79, %c8_i32_80 : i32
    %124 = tpu.assume_multiple %123, 8 : i32
    %cst_81 = arith.constant dense<0.000000e+00> : vector<8x128xf32>
    %125 = tpu.matmul %122, %97, %cst_81 {dimension_numbers = #tpu.dot_dimension_numbers<[1], [0], [0], [1], [0, 0, 1, 1], [], []>} : vector<8x128xf32>, vector<128x128xf32>, vector<8x128xf32> -> vector<8x128xf32>
    %126 = arith.index_cast %124 : i32 to index
    %c0_82 = arith.constant 0 : index
    %127 = vector.load %arg10[%126, %c0_82] : memref<64x128xf32, #tpu.memory_space<vmem>>, vector<8x128xf32>
    %128 = arith.addf %125, %127 : vector<8x128xf32>
    %cst_83 = arith.constant 0.000000e+00 : f32
    %129 = vector.broadcast %cst_83 : f32 to vector<8x128xf32>
    %130 = arith.maximumf %128, %129 : vector<8x128xf32>
    %c3_i32_84 = arith.constant 3 : i32
    %c8_i32_85 = arith.constant 8 : i32
    %131 = arith.muli %c3_i32_84, %c8_i32_85 : i32
    %132 = tpu.assume_multiple %131, 8 : i32
    %cst_86 = arith.constant dense<0.000000e+00> : vector<8x128xf32>
    %133 = tpu.matmul %130, %97, %cst_86 {dimension_numbers = #tpu.dot_dimension_numbers<[1], [0], [0], [1], [0, 0, 1, 1], [], []>} : vector<8x128xf32>, vector<128x128xf32>, vector<8x128xf32> -> vector<8x128xf32>
    %134 = arith.index_cast %132 : i32 to index
    %c0_87 = arith.constant 0 : index
    %135 = vector.load %arg10[%134, %c0_87] : memref<64x128xf32, #tpu.memory_space<vmem>>, vector<8x128xf32>
    %136 = arith.addf %133, %135 : vector<8x128xf32>
    %cst_88 = arith.constant 0.000000e+00 : f32
    %137 = vector.broadcast %cst_88 : f32 to vector<8x128xf32>
    %138 = arith.maximumf %136, %137 : vector<8x128xf32>
    %c4_i32_89 = arith.constant 4 : i32
    %c8_i32_90 = arith.constant 8 : i32
    %139 = arith.muli %c4_i32_89, %c8_i32_90 : i32
    %140 = tpu.assume_multiple %139, 8 : i32
    %cst_91 = arith.constant dense<0.000000e+00> : vector<8x128xf32>
    %141 = tpu.matmul %138, %97, %cst_91 {dimension_numbers = #tpu.dot_dimension_numbers<[1], [0], [0], [1], [0, 0, 1, 1], [], []>} : vector<8x128xf32>, vector<128x128xf32>, vector<8x128xf32> -> vector<8x128xf32>
    %142 = arith.index_cast %140 : i32 to index
    %c0_92 = arith.constant 0 : index
    %143 = vector.load %arg10[%142, %c0_92] : memref<64x128xf32, #tpu.memory_space<vmem>>, vector<8x128xf32>
    %144 = arith.addf %141, %143 : vector<8x128xf32>
    %cst_93 = arith.constant 0.000000e+00 : f32
    %145 = vector.broadcast %cst_93 : f32 to vector<8x128xf32>
    %146 = arith.maximumf %144, %145 : vector<8x128xf32>
    %c5_i32_94 = arith.constant 5 : i32
    %c8_i32_95 = arith.constant 8 : i32
    %147 = arith.muli %c5_i32_94, %c8_i32_95 : i32
    %148 = tpu.assume_multiple %147, 8 : i32
    %cst_96 = arith.constant dense<0.000000e+00> : vector<8x128xf32>
    %149 = tpu.matmul %146, %97, %cst_96 {dimension_numbers = #tpu.dot_dimension_numbers<[1], [0], [0], [1], [0, 0, 1, 1], [], []>} : vector<8x128xf32>, vector<128x128xf32>, vector<8x128xf32> -> vector<8x128xf32>
    %150 = arith.index_cast %148 : i32 to index
    %c0_97 = arith.constant 0 : index
    %151 = vector.load %arg10[%150, %c0_97] : memref<64x128xf32, #tpu.memory_space<vmem>>, vector<8x128xf32>
    %152 = arith.addf %149, %151 : vector<8x128xf32>
    %cst_98 = arith.constant 0.000000e+00 : f32
    %153 = vector.broadcast %cst_98 : f32 to vector<8x128xf32>
    %154 = arith.maximumf %152, %153 : vector<8x128xf32>
    %c6_i32_99 = arith.constant 6 : i32
    %c8_i32_100 = arith.constant 8 : i32
    %155 = arith.muli %c6_i32_99, %c8_i32_100 : i32
    %156 = tpu.assume_multiple %155, 8 : i32
    %cst_101 = arith.constant dense<0.000000e+00> : vector<8x128xf32>
    %157 = tpu.matmul %154, %97, %cst_101 {dimension_numbers = #tpu.dot_dimension_numbers<[1], [0], [0], [1], [0, 0, 1, 1], [], []>} : vector<8x128xf32>, vector<128x128xf32>, vector<8x128xf32> -> vector<8x128xf32>
    %158 = arith.index_cast %156 : i32 to index
    %c0_102 = arith.constant 0 : index
    %159 = vector.load %arg10[%158, %c0_102] : memref<64x128xf32, #tpu.memory_space<vmem>>, vector<8x128xf32>
    %160 = arith.addf %157, %159 : vector<8x128xf32>
    %cst_103 = arith.constant 0.000000e+00 : f32
    %161 = vector.broadcast %cst_103 : f32 to vector<8x128xf32>
    %162 = arith.maximumf %160, %161 : vector<8x128xf32>
    %c7_i32_104 = arith.constant 7 : i32
    %c8_i32_105 = arith.constant 8 : i32
    %163 = arith.muli %c7_i32_104, %c8_i32_105 : i32
    %164 = tpu.assume_multiple %163, 8 : i32
    %cst_106 = arith.constant dense<0.000000e+00> : vector<8x128xf32>
    %165 = tpu.matmul %162, %97, %cst_106 {dimension_numbers = #tpu.dot_dimension_numbers<[1], [0], [0], [1], [0, 0, 1, 1], [], []>} : vector<8x128xf32>, vector<128x128xf32>, vector<8x128xf32> -> vector<8x128xf32>
    %166 = arith.index_cast %164 : i32 to index
    %c0_107 = arith.constant 0 : index
    %167 = vector.load %arg10[%166, %c0_107] : memref<64x128xf32, #tpu.memory_space<vmem>>, vector<8x128xf32>
    %168 = arith.addf %165, %167 : vector<8x128xf32>
    %cst_108 = arith.constant 0.000000e+00 : f32
    %169 = vector.broadcast %cst_108 : f32 to vector<8x128xf32>
    %170 = arith.maximumf %168, %169 : vector<8x128xf32>
    %c8_i32_109 = arith.constant 8 : i32
    %c1_110 = arith.constant 1 : index
    %c0_111 = arith.constant 0 : index
    %c0_112 = arith.constant 0 : index
    %171 = vector.load %arg12[%c1_110, %c0_111, %c0_112] : memref<2x8x128xf32, #tpu.memory_space<vmem>>, vector<1x8x128xf32>
    %172 = vector.shape_cast %171 : vector<1x8x128xf32> to vector<8x128xf32>
    %173 = vector.shape_cast %170 : vector<8x128xf32> to vector<1x8x128xf32>
    tpu.vector_store %arg12[%c1_110, %c0_111, %c0_112], %173 {strides = array<i32>} : memref<2x8x128xf32, #tpu.memory_space<vmem>>, vector<1x8x128xf32>,
    %c0_i32_113 = arith.constant 0 : i32
    %174 = arith.cmpi eq, %arg1, %c0_i32_113 : i32
    %175 = arith.extui %174 : i1 to i32
    %c0_i32_114 = arith.constant 0 : i32
    %176 = arith.cmpi ne, %175, %c0_i32_114 : i32
    scf.if %176 {
      %c0_115 = arith.constant 0 : index
      %c0_116 = arith.constant 0 : index
      %177 = vector.load %arg7[%c0_115, %c0_116] : memref<128x128xf32, #tpu.memory_space<vmem>>, vector<128x128xf32>
      %cst_117 = arith.constant dense<0.000000e+00> : vector<8x128xf32>
      %178 = tpu.matmul %170, %177, %cst_117 {dimension_numbers = #tpu.dot_dimension_numbers<[1], [0], [0], [1], [0, 0, 1, 1], [], []>} : vector<8x128xf32>, vector<128x128xf32>, vector<8x128xf32> -> vector<8x128xf32>
      %c0_118 = arith.constant 0 : index
      %c0_119 = arith.constant 0 : index
      %179 = vector.load %arg8[%c0_118, %c0_119] : memref<1x128xf32, #tpu.memory_space<vmem>>, vector<1x128xf32>
      %180 = vector.broadcast %179 : vector<1x128xf32> to vector<8x128xf32>
      %181 = arith.addf %178, %180 : vector<8x128xf32>
      %c0_120 = arith.constant 0 : index
      %c0_121 = arith.constant 0 : index
      %182 = vector.load %arg9[%c0_120, %c0_121] : memref<8x128xf32, #tpu.memory_space<vmem>>, vector<8x128xf32>
      tpu.vector_store %arg9[%c0_120, %c0_121], %181 {strides = array<i32>} : memref<8x128xf32, #tpu.memory_space<vmem>>, vector<8x128xf32>,
    } else {
    }
    return
  }
  func.func @transform_0(%arg0: i32, %arg1: i32) -> (i32, i32, i32) {
    %c0_i32 = arith.constant 0 : i32
    %c0_i32_0 = arith.constant 0 : i32
    return %arg0, %arg1, %c0_i32 : i32, i32, i32
  }
  func.func @transform_1(%arg0: i32, %arg1: i32) -> (i32, i32) {
    %c0_i32 = arith.constant 0 : i32
    %c0_i32_0 = arith.constant 0 : i32
    %c0_i32_1 = arith.constant 0 : i32
    return %c0_i32, %c0_i32_0 : i32, i32
  }
  func.func @transform_2(%arg0: i32, %arg1: i32) -> (i32, i32) {
    %c0_i32 = arith.constant 0 : i32
    %c0_i32_0 = arith.constant 0 : i32
    %c0_i32_1 = arith.constant 0 : i32
    return %c0_i32, %c0_i32_0 : i32, i32
  }
  func.func @transform_3(%arg0: i32, %arg1: i32) -> (i32, i32) {
    %c0_i32 = arith.constant 0 : i32
    %c0_i32_0 = arith.constant 0 : i32
    %c0_i32_1 = arith.constant 0 : i32
    return %c0_i32, %c0_i32_0 : i32, i32
  }
  func.func @transform_4(%arg0: i32, %arg1: i32) -> (i32, i32) {
    %c0_i32 = arith.constant 0 : i32
    %c0_i32_0 = arith.constant 0 : i32
    %c0_i32_1 = arith.constant 0 : i32
    return %c0_i32, %c0_i32_0 : i32, i32
  }
  func.func @transform_5(%arg0: i32, %arg1: i32) -> (i32, i32) {
    %c0_i32 = arith.constant 0 : i32
    %c0_i32_0 = arith.constant 0 : i32
    %c0_i32_1 = arith.constant 0 : i32
    return %c0_i32, %c0_i32_0 : i32, i32
  }
  func.func @transform_6(%arg0: i32, %arg1: i32) -> (i32, i32) {
    %c0_i32 = arith.constant 0 : i32
    %c0_i32_0 = arith.constant 0 : i32
    %c0_i32_1 = arith.constant 0 : i32
    return %c0_i32, %c0_i32_0 : i32, i32
  }
  func.func @transform_7(%arg0: i32, %arg1: i32) -> (i32, i32) {
    %c0_i32 = arith.constant 0 : i32
    %c0_i32_0 = arith.constant 0 : i32
    return %arg0, %c0_i32 : i32, i32
  }
}

</mosaic_0001>

<llo_original>
// kernel: tpu_custom_call.1
$region0: #{tpu_custom_call.1}
  #allocation0 [shape = 'u32[]', space=smem, size = 0x4, offset = 0x4, fixed_abs, tag = 'smem constant byte address 0x4 - core index']
  #allocation1 [shape = 'u32[144,128]{1,0:T(1,128)}', space=vmem, size = 0x12000, scoped, tag = 'internal scratch']
  #allocation2 [shape = 'f32[64,128]{1,0:T(8,128)}', space=vmem, size = 0x8000, scoped, tag = 'scratch operand']
  #allocation3 [shape = 'f32[64,128]{1,0:T(8,128)}', space=vmem, size = 0x8000, scoped, tag = 'scratch operand']
  #allocation4 [shape = 'f32[2,8,128]{2,1,0:T(8,128)}', space=vmem, size = 0x2000, scoped, tag = 'scratch operand']
  %s0 = inlined_call_operand.hbm [shape: f32[1,64,128], index: 0, kind: input, shape index: {}]
  %s1 = inlined_call_operand.hbm [shape: f32[128,128], index: 1, kind: input, shape index: {}]
  %s2 = inlined_call_operand.hbm [shape: f32[128,128], index: 2, kind: input, shape index: {}]
  %s3 = inlined_call_operand.hbm [shape: f32[128,128], index: 3, kind: input, shape index: {}]
  %s4 = inlined_call_operand.vmem [shape: f32[1,128], index: 4, kind: input, shape index: {}]
  %s5 = inlined_call_operand.hbm [shape: f32[128,128], index: 5, kind: input, shape index: {}]
  %s6 = inlined_call_operand.vmem [shape: f32[1,128], index: 6, kind: input, shape index: {}]
  %s7 = inlined_call_operand.hbm [shape: f32[8,128], index: 7, kind: output, shape index: {}]
  %s8 = sld [smem:[#allocation0]]
  $region66: #{tpu_custom_call.1} parent=0
    _
  %s10 = ssub.s32 1, %s8
  %s11 = scalar_select 0, %s10, %s8
  $region1: #{tpu_custom_call.1} parent=0
    #allocation5 [shape = 'u8[32768]{0}', space=vmem, size = 0x8000, scoped, tag = 'input window, operand 0, single buffered']
    #allocation6 [shape = 's32[1]{0}', space=sflag, size = 0x4, scoped, tag = 'scoped memory for tpu_custom_call.1']
    #allocation7 [shape = 's32[1]{0}', space=sflag, size = 0x4, scoped, tag = 'scoped memory for tpu_custom_call.1']
    #allocation8 [shape = 'u8[65536]{0}', space=vmem, size = 0x10000, scoped, tag = 'input window, operand 1, single buffered']
    #allocation9 [shape = 's32[1]{0}', space=sflag, size = 0x4, scoped, tag = 'scoped memory for tpu_custom_call.1']
    #allocation10 [shape = 'u8[65536]{0}', space=vmem, size = 0x10000, scoped, tag = 'input window, operand 2, single buffered']
    #allocation11 [shape = 'u8[65536]{0}', space=vmem, size = 0x10000, scoped, tag = 'input window, operand 3, single buffered']
    #allocation12 [shape = 's32[1]{0}', space=sflag, size = 0x4, scoped, tag = 'scoped memory for tpu_custom_call.1']
    #allocation13 [shape = 'u8[65536]{0}', space=vmem, size = 0x10000, scoped, tag = 'input window, operand 5, single buffered']
    #allocation14 [shape = 'u8[4096]{0}', space=vmem, size = 0x1000, scoped, tag = 'output window, operand 0, single buffered']
    %12 = vsyncpa [#allocation6], 0
    %13 = vsyncpa [#allocation9], 0
    %14 = vsyncpa [#allocation12], 0
    %15 = vsyncpa [#allocation7], 0
    // Predicated region
    $region2: #{tpu_custom_call.1} parent=1 // pred_check
      _
    $region3: #{tpu_custom_call.1} parent=1 // pred_check_branch
      %17 = sbr.rel (0) target = $region5
    $region4: #{tpu_custom_call.1} parent=1 // pred_region
      %s19 = ssub.s32 1024, 1024
      %20 = vsyncadd [#allocation6], %s19
      %s21 = sshll.u32 [#allocation5], 4
      %s22 = int_to_ptr.vmem [resolvable:$true] %s21
      %27 = dma.hbm_to_vmem [thread:$0]  %s0, 1024, %s22, [#allocation6], 128, 128, 8
    $region5: #{tpu_custom_call.1} parent=1 // pred_fallthru
      _
    // Predicated region
    $region6: #{tpu_custom_call.1} parent=1 // pred_check
      _
    $region7: #{tpu_custom_call.1} parent=1 // pred_check_branch
      %29 = sbr.rel (0) target = $region9
    $region8: #{tpu_custom_call.1} parent=1 // pred_region
      %s31 = ssub.s32 2048, 2048
      %32 = vsyncadd [#allocation9], %s31
      %s33 = sshll.u32 [#allocation8], 4
      %s34 = int_to_ptr.vmem [resolvable:$true] %s33
      %39 = dma.hbm_to_vmem [thread:$0]  %s1, 2048, %s34, [#allocation9], 128, 128, 8
    $region9: #{tpu_custom_call.1} parent=1 // pred_fallthru
      _
    // Predicated region
    $region10: #{tpu_custom_call.1} parent=1 // pred_check
      _
    $region11: #{tpu_custom_call.1} parent=1 // pred_check_branch
      %41 = sbr.rel (0) target = $region13
    $region12: #{tpu_custom_call.1} parent=1 // pred_region
      %s43 = ssub.s32 2048, 2048
      %44 = vsyncadd [#allocation9], %s43
      %s45 = sshll.u32 [#allocation10], 4
      %s46 = int_to_ptr.vmem [resolvable:$true] %s45
      %51 = dma.hbm_to_vmem [thread:$0]  %s2, 2048, %s46, [#allocation9], 128, 128, 8
    $region13: #{tpu_custom_call.1} parent=1 // pred_fallthru
      _
    // Predicated region
    $region14: #{tpu_custom_call.1} parent=1 // pred_check
      _
    $region15: #{tpu_custom_call.1} parent=1 // pred_check_branch
      %53 = sbr.rel (0) target = $region17
    $region16: #{tpu_custom_call.1} parent=1 // pred_region
      %s55 = ssub.s32 2048, 2048
      %56 = vsyncadd [#allocation12], %s55
      %s57 = sshll.u32 [#allocation11], 4
      %s58 = int_to_ptr.vmem [resolvable:$true] %s57
      %63 = dma.hbm_to_vmem [thread:$0]  %s3, 2048, %s58, [#allocation12], 128, 128, 8
    $region17: #{tpu_custom_call.1} parent=1 // pred_fallthru
      _
    // Predicated region
    $region18: #{tpu_custom_call.1} parent=1 // pred_check
      _
    $region19: #{tpu_custom_call.1} parent=1 // pred_check_branch
      %65 = sbr.rel (0) target = $region21
    $region20: #{tpu_custom_call.1} parent=1 // pred_region
      _
    $region21: #{tpu_custom_call.1} parent=1 // pred_fallthru
      _
    // Predicated region
    $region22: #{tpu_custom_call.1} parent=1 // pred_check
      _
    $region23: #{tpu_custom_call.1} parent=1 // pred_check_branch
      %67 = sbr.rel (0) target = $region25
    $region24: #{tpu_custom_call.1} parent=1 // pred_region
      %s69 = ssub.s32 2048, 2048
      %70 = vsyncadd [#allocation12], %s69
      %s71 = sshll.u32 [#allocation13], 4
      %s72 = int_to_ptr.vmem [resolvable:$true] %s71
      %77 = dma.hbm_to_vmem [thread:$0]  %s5, 2048, %s72, [#allocation12], 128, 128, 8
    $region25: #{tpu_custom_call.1} parent=1 // pred_fallthru
      _
    // Predicated region
    $region26: #{tpu_custom_call.1} parent=1 // pred_check
      _
    $region27: #{tpu_custom_call.1} parent=1 // pred_check_branch
      %79 = sbr.rel (0) target = $region29
    $region28: #{tpu_custom_call.1} parent=1 // pred_region
      _
    $region29: #{tpu_custom_call.1} parent=1 // pred_fallthru
      _
    // Predicated region
    $region30: #{tpu_custom_call.1} parent=1 // pred_check
      _
    $region31: #{tpu_custom_call.1} parent=1 // pred_check_branch
      %81 = sbr.rel (0) target = $region33
    $region32: #{tpu_custom_call.1} parent=1 // pred_region
      %82 = dma.done [#allocation6], 1024
    $region33: #{tpu_custom_call.1} parent=1 // pred_fallthru
      _
    // Predicated region
    $region34: #{tpu_custom_call.1} parent=1 // pred_check
      _
    $region35: #{tpu_custom_call.1} parent=1 // pred_check_branch
      %84 = sbr.rel (0) target = $region37
    $region36: #{tpu_custom_call.1} parent=1 // pred_region
      %85 = dma.done [#allocation9], 2048
    $region37: #{tpu_custom_call.1} parent=1 // pred_fallthru
      _
    // Predicated region
    $region38: #{tpu_custom_call.1} parent=1 // pred_check
      _
    $region39: #{tpu_custom_call.1} parent=1 // pred_check_branch
      %87 = sbr.rel (0) target = $region41
    $region40: #{tpu_custom_call.1} parent=1 // pred_region
      %88 = dma.done [#allocation9], 2048
    $region41: #{tpu_custom_call.1} parent=1 // pred_fallthru
      _
    // Predicated region
    $region42: #{tpu_custom_call.1} parent=1 // pred_check
      _
    $region43: #{tpu_custom_call.1} parent=1 // pred_check_branch
      %90 = sbr.rel (0) target = $region45
    $region44: #{tpu_custom_call.1} parent=1 // pred_region
      %91 = dma.done [#allocation12], 2048
    $region45: #{tpu_custom_call.1} parent=1 // pred_fallthru
      _
    // Predicated region
    $region46: #{tpu_custom_call.1} parent=1 // pred_check
      _
    $region47: #{tpu_custom_call.1} parent=1 // pred_check_branch
      %93 = sbr.rel (0) target = $region49
    $region48: #{tpu_custom_call.1} parent=1 // pred_region
      %94 = dma.done [#allocation12], 2048
    $region49: #{tpu_custom_call.1} parent=1 // pred_fallthru
      _
    %p95 = scmp.eq.s32.totalorder 0, 0
    // Predicated region
    $region50: #{tpu_custom_call.1} parent=1 // pred_check
      %p96 = pneg %p95
    $region51: #{tpu_custom_call.1} parent=1 // pred_check_branch
      %98 = sbr.rel (%p96) target = $region53
    $region52: #{tpu_custom_call.1} parent=1 // pred_region
      %99 = vst [vmem:[#allocation4] sm:$0xff] 0.0
      %100 = vst [vmem:[#allocation4 + $0x8] sm:$0xff] 0.0
      %101 = vst [vmem:[#allocation14] sm:$0xff] 0.0
    $region53: #{tpu_custom_call.1} parent=1 // pred_fallthru
      _
    %v102 = vld [vmem:[#allocation8] sm:$0xff]
    %v103 = vld [vmem:[#allocation8 + $0x8] sm:$0xff]
    %v104 = vld [vmem:[#allocation8 + $0x10] sm:$0xff]
    %v105 = vld [vmem:[#allocation8 + $0x18] sm:$0xff]
    %v106 = vld [vmem:[#allocation8 + $0x20] sm:$0xff]
    %v107 = vld [vmem:[#allocation8 + $0x28] sm:$0xff]
    %v108 = vld [vmem:[#allocation8 + $0x30] sm:$0xff]
    %v109 = vld [vmem:[#allocation8 + $0x38] sm:$0xff]
    %v110 = vld [vmem:[#allocation8 + $0x40] sm:$0xff]
    %v111 = vld [vmem:[#allocation8 + $0x48] sm:$0xff]
    %v112 = vld [vmem:[#allocation8 + $0x50] sm:$0xff]
    %v113 = vld [vmem:[#allocation8 + $0x58] sm:$0xff]
    %v114 = vld [vmem:[#allocation8 + $0x60] sm:$0xff]
    %v115 = vld [vmem:[#allocation8 + $0x68] sm:$0xff]
    %v116 = vld [vmem:[#allocation8 + $0x70] sm:$0xff]
    %v117 = vld [vmem:[#allocation8 + $0x78] sm:$0xff]
    %v118 = vld [vmem:[#allocation4] sm:$0xff]
    %v119 = vld [vmem:[#allocation5] sm:$0xff]
    %120 = vmatprep.subr.mxu0 0.0
    %121 = vmatpush1.msra.mxu0 %v117
    %122 = vmatprep.subr.mxu0 0.0
    %123 = vmatpush1.msra.mxu0 %v116
    %124 = vmatprep.subr.mxu0 0.0
    %125 = vmatpush1.msra.mxu0 %v115
    %126 = vmatprep.subr.mxu0 0.0
    %127 = vmatpush1.msra.mxu0 %v114
    %128 = vmatprep.subr.mxu0 0.0
    %129 = vmatpush1.msra.mxu0 %v113
    %130 = vmatprep.subr.mxu0 0.0
    %131 = vmatpush1.msra.mxu0 %v112
    %132 = vmatprep.subr.mxu0 0.0
    %133 = vmatpush1.msra.mxu0 %v111
    %134 = vmatprep.subr.mxu0 0.0
    %135 = vmatpush1.msra.mxu0 %v110
    %136 = vmatprep.subr.mxu0 0.0
    %137 = vmatpush1.msra.mxu0 %v109
    %138 = vmatprep.subr.mxu0 0.0
    %139 = vmatpush1.msra.mxu0 %v108
    %140 = vmatprep.subr.mxu0 0.0
    %141 = vmatpush1.msra.mxu0 %v107
    %142 = vmatprep.subr.mxu0 0.0
    %143 = vmatpush1.msra.mxu0 %v106
    %144 = vmatprep.subr.mxu0 0.0
    %145 = vmatpush1.msra.mxu0 %v105
    %146 = vmatprep.subr.mxu0 0.0
    %147 = vmatpush1.msra.mxu0 %v104
    %148 = vmatprep.subr.mxu0 0.0
    %149 = vmatpush1.msra.mxu0 %v103
    %150 = vmatprep.subr.mxu0 0.0
    %151 = vmatpush1.msra.mxu0 %v102
    %152 = vmatprep.subr.mxu0 0.0
    %153 = vmatpush2.msra.mxu0 0.0
    %154 = vmatprep.subr.mxu0 0.0
    %155 = vmatpush2.msra.mxu0 0.0
    %156 = vmatprep.subr.mxu0 0.0
    %157 = vmatpush2.msra.mxu0 0.0
    %158 = vmatprep.subr.mxu0 0.0
    %159 = vmatpush2.msra.mxu0 0.0
    %160 = vmatprep.subr.mxu0 0.0
    %161 = vmatpush2.msra.mxu0 0.0
    %162 = vmatprep.subr.mxu0 0.0
    %163 = vmatpush2.msra.mxu0 0.0
    %164 = vmatprep.subr.mxu0 0.0
    %165 = vmatpush2.msra.mxu0 0.0
    %166 = vmatprep.subr.mxu0 0.0
    %167 = vmatpush2.msra.mxu0 0.0
    %168 = vmatprep.subr.mxu0 0.0
    %169 = vmatpush2.msra.mxu0 0.0
    %170 = vmatprep.subr.mxu0 0.0
    %171 = vmatpush2.msra.mxu0 0.0
    %172 = vmatprep.subr.mxu0 0.0
    %173 = vmatpush2.msra.mxu0 0.0
    %174 = vmatprep.subr.mxu0 0.0
    %175 = vmatpush2.msra.mxu0 0.0
    %176 = vmatprep.subr.mxu0 0.0
    %177 = vmatpush2.msra.mxu0 0.0
    %178 = vmatprep.subr.mxu0 0.0
    %179 = vmatpush2.msra.mxu0 0.0
    %180 = vmatprep.subr.mxu0 0.0
    %181 = vmatpush2.msra.mxu0 0.0
    %182 = vmatprep.subr.mxu0 0.0
    %183 = vmatpush2.msra.mxu0 0.0
    %184 = vmatprep.mubr.f32.mxu0 0.0
    %185 = vmatmul.mubr.f32.gmra.mxu0 %v118
    %v186 = vpop.f32.mrf.mxu0
    %v187 = vadd.f32 %v119, %v186
    %v188 = vpop.f32.mrf.mxu0
    %189 = vdwg.mxu0
    %v190 = vmax.f32 %v187, 0.0
    %191 = vst [vmem:[#allocation3] sm:$0xff] %v190
    %s192 = scalar_lea.vmem [#allocation5], 8
    %v193 = vld [vmem:[%s192] sm:$0xff]
    %194 = vmatprep.subr.mxu0 0.0
    %195 = vmatpush1.msra.mxu0 %v117
    %196 = vmatprep.subr.mxu0 0.0
    %197 = vmatpush1.msra.mxu0 %v116
    %198 = vmatprep.subr.mxu0 0.0
    %199 = vmatpush1.msra.mxu0 %v115
    %200 = vmatprep.subr.mxu0 0.0
    %201 = vmatpush1.msra.mxu0 %v114
    %202 = vmatprep.subr.mxu0 0.0
    %203 = vmatpush1.msra.mxu0 %v113
    %204 = vmatprep.subr.mxu0 0.0
    %205 = vmatpush1.msra.mxu0 %v112
    %206 = vmatprep.subr.mxu0 0.0
    %207 = vmatpush1.msra.mxu0 %v111
    %208 = vmatprep.subr.mxu0 0.0
    %209 = vmatpush1.msra.mxu0 %v110
    %210 = vmatprep.subr.mxu0 0.0
    %211 = vmatpush1.msra.mxu0 %v109
    %212 = vmatprep.subr.mxu0 0.0
    %213 = vmatpush1.msra.mxu0 %v108
    %214 = vmatprep.subr.mxu0 0.0
    %215 = vmatpush1.msra.mxu0 %v107
    %216 = vmatprep.subr.mxu0 0.0
    %217 = vmatpush1.msra.mxu0 %v106
    %218 = vmatprep.subr.mxu0 0.0
    %219 = vmatpush1.msra.mxu0 %v105
    %220 = vmatprep.subr.mxu0 0.0
    %221 = vmatpush1.msra.mxu0 %v104
    %222 = vmatprep.subr.mxu0 0.0
    %223 = vmatpush1.msra.mxu0 %v103
    %224 = vmatprep.subr.mxu0 0.0
    %225 = vmatpush1.msra.mxu0 %v102
    %226 = vmatprep.subr.mxu0 0.0
    %227 = vmatpush2.msra.mxu0 0.0
    %228 = vmatprep.subr.mxu0 0.0
    %229 = vmatpush2.msra.mxu0 0.0
    %230 = vmatprep.subr.mxu0 0.0
    %231 = vmatpush2.msra.mxu0 0.0
    %232 = vmatprep.subr.mxu0 0.0
    %233 = vmatpush2.msra.mxu0 0.0
    %234 = vmatprep.subr.mxu0 0.0
    %235 = vmatpush2.msra.mxu0 0.0
    %236 = vmatprep.subr.mxu0 0.0
    %237 = vmatpush2.msra.mxu0 0.0
    %238 = vmatprep.subr.mxu0 0.0
    %239 = vmatpush2.msra.mxu0 0.0
    %240 = vmatprep.subr.mxu0 0.0
    %241 = vmatpush2.msra.mxu0 0.0
    %242 = vmatprep.subr.mxu0 0.0
    %243 = vmatpush2.msra.mxu0 0.0
    %244 = vmatprep.subr.mxu0 0.0
    %245 = vmatpush2.msra.mxu0 0.0
    %246 = vmatprep.subr.mxu0 0.0
    %247 = vmatpush2.msra.mxu0 0.0
    %248 = vmatprep.subr.mxu0 0.0
    %249 = vmatpush2.msra.mxu0 0.0
    %250 = vmatprep.subr.mxu0 0.0
    %251 = vmatpush2.msra.mxu0 0.0
    %252 = vmatprep.subr.mxu0 0.0
    %253 = vmatpush2.msra.mxu0 0.0
    %254 = vmatprep.subr.mxu0 0.0
    %255 = vmatpush2.msra.mxu0 0.0
    %256 = vmatprep.subr.mxu0 0.0
    %257 = vmatpush2.msra.mxu0 0.0
    %258 = vmatprep.mubr.f32.mxu0 0.0
    %259 = vmatmul.mubr.f32.gmra.mxu0 %v190
    %v260 = vpop.f32.mrf.mxu0
    %v261 = vadd.f32 %v193, %v260
    %v262 = vpop.f32.mrf.mxu0
    %263 = vdwg.mxu0
    %v264 = vmax.f32 %v261, 0.0
    %s265 = scalar_lea.vmem [#allocation3], 8
    %266 = vst [vmem:[%s265] sm:$0xff] %v264
    %s267 = scalar_lea.vmem [#allocation5], 16
    %v268 = vld [vmem:[%s267] sm:$0xff]
    %269 = vmatprep.subr.mxu0 0.0
    %270 = vmatpush1.msra.mxu0 %v117
    %271 = vmatprep.subr.mxu0 0.0
    %272 = vmatpush1.msra.mxu0 %v116
    %273 = vmatprep.subr.mxu0 0.0
    %274 = vmatpush1.msra.mxu0 %v115
    %275 = vmatprep.subr.mxu0 0.0
    %276 = vmatpush1.msra.mxu0 %v114
    %277 = vmatprep.subr.mxu0 0.0
    %278 = vmatpush1.msra.mxu0 %v113
    %279 = vmatprep.subr.mxu0 0.0
    %280 = vmatpush1.msra.mxu0 %v112
    %281 = vmatprep.subr.mxu0 0.0
    %282 = vmatpush1.msra.mxu0 %v111
    %283 = vmatprep.subr.mxu0 0.0
    %284 = vmatpush1.msra.mxu0 %v110
    %285 = vmatprep.subr.mxu0 0.0
    %286 = vmatpush1.msra.mxu0 %v109
    %287 = vmatprep.subr.mxu0 0.0
    %288 = vmatpush1.msra.mxu0 %v108
    %289 = vmatprep.subr.mxu0 0.0
    %290 = vmatpush1.msra.mxu0 %v107
    %291 = vmatprep.subr.mxu0 0.0
    %292 = vmatpush1.msra.mxu0 %v106
    %293 = vmatprep.subr.mxu0 0.0
    %294 = vmatpush1.msra.mxu0 %v105
    %295 = vmatprep.subr.mxu0 0.0
    %296 = vmatpush1.msra.mxu0 %v104
    %297 = vmatprep.subr.mxu0 0.0
    %298 = vmatpush1.msra.mxu0 %v103
    %299 = vmatprep.subr.mxu0 0.0
    %300 = vmatpush1.msra.mxu0 %v102
    %301 = vmatprep.subr.mxu0 0.0
    %302 = vmatpush2.msra.mxu0 0.0
    %303 = vmatprep.subr.mxu0 0.0
    %304 = vmatpush2.msra.mxu0 0.0
    %305 = vmatprep.subr.mxu0 0.0
    %306 = vmatpush2.msra.mxu0 0.0
    %307 = vmatprep.subr.mxu0 0.0
    %308 = vmatpush2.msra.mxu0 0.0
    %309 = vmatprep.subr.mxu0 0.0
    %310 = vmatpush2.msra.mxu0 0.0
    %311 = vmatprep.subr.mxu0 0.0
    %312 = vmatpush2.msra.mxu0 0.0
    %313 = vmatprep.subr.mxu0 0.0
    %314 = vmatpush2.msra.mxu0 0.0
    %315 = vmatprep.subr.mxu0 0.0
    %316 = vmatpush2.msra.mxu0 0.0
    %317 = vmatprep.subr.mxu0 0.0
    %318 = vmatpush2.msra.mxu0 0.0
    %319 = vmatprep.subr.mxu0 0.0
    %320 = vmatpush2.msra.mxu0 0.0
    %321 = vmatprep.subr.mxu0 0.0
    %322 = vmatpush2.msra.mxu0 0.0
    %323 = vmatprep.subr.mxu0 0.0
    %324 = vmatpush2.msra.mxu0 0.0
    %325 = vmatprep.subr.mxu0 0.0
    %326 = vmatpush2.msra.mxu0 0.0
    %327 = vmatprep.subr.mxu0 0.0
    %328 = vmatpush2.msra.mxu0 0.0
    %329 = vmatprep.subr.mxu0 0.0
    %330 = vmatpush2.msra.mxu0 0.0
    %331 = vmatprep.subr.mxu0 0.0
    %332 = vmatpush2.msra.mxu0 0.0
    %333 = vmatprep.mubr.f32.mxu0 0.0
    %334 = vmatmul.mubr.f32.gmra.mxu0 %v264
    %v335 = vpop.f32.mrf.mxu0
    %v336 = vadd.f32 %v268, %v335
    %v337 = vpop.f32.mrf.mxu0
    %338 = vdwg.mxu0
    %v339 = vmax.f32 %v336, 0.0
    %s340 = scalar_lea.vmem [#allocation3], 16
    %341 = vst [vmem:[%s340] sm:$0xff] %v339
    %s342 = scalar_lea.vmem [#allocation5], 24
    %v343 = vld [vmem:[%s342] sm:$0xff]
    %344 = vmatprep.subr.mxu0 0.0
    %345 = vmatpush1.msra.mxu0 %v117
    %346 = vmatprep.subr.mxu0 0.0
    %347 = vmatpush1.msra.mxu0 %v116
    %348 = vmatprep.subr.mxu0 0.0
    %349 = vmatpush1.msra.mxu0 %v115
    %350 = vmatprep.subr.mxu0 0.0
    %351 = vmatpush1.msra.mxu0 %v114
    %352 = vmatprep.subr.mxu0 0.0
    %353 = vmatpush1.msra.mxu0 %v113
    %354 = vmatprep.subr.mxu0 0.0
    %355 = vmatpush1.msra.mxu0 %v112
    %356 = vmatprep.subr.mxu0 0.0
    %357 = vmatpush1.msra.mxu0 %v111
    %358 = vmatprep.subr.mxu0 0.0
    %359 = vmatpush1.msra.mxu0 %v110
    %360 = vmatprep.subr.mxu0 0.0
    %361 = vmatpush1.msra.mxu0 %v109
    %362 = vmatprep.subr.mxu0 0.0
    %363 = vmatpush1.msra.mxu0 %v108
    %364 = vmatprep.subr.mxu0 0.0
    %365 = vmatpush1.msra.mxu0 %v107
    %366 = vmatprep.subr.mxu0 0.0
    %367 = vmatpush1.msra.mxu0 %v106
    %368 = vmatprep.subr.mxu0 0.0
    %369 = vmatpush1.msra.mxu0 %v105
    %370 = vmatprep.subr.mxu0 0.0
    %371 = vmatpush1.msra.mxu0 %v104
    %372 = vmatprep.subr.mxu0 0.0
    %373 = vmatpush1.msra.mxu0 %v103
    %374 = vmatprep.subr.mxu0 0.0
    %375 = vmatpush1.msra.mxu0 %v102
    %376 = vmatprep.subr.mxu0 0.0
    %377 = vmatpush2.msra.mxu0 0.0
    %378 = vmatprep.subr.mxu0 0.0
    %379 = vmatpush2.msra.mxu0 0.0
    %380 = vmatprep.subr.mxu0 0.0
    %381 = vmatpush2.msra.mxu0 0.0
    %382 = vmatprep.subr.mxu0 0.0
    %383 = vmatpush2.msra.mxu0 0.0
    %384 = vmatprep.subr.mxu0 0.0
    %385 = vmatpush2.msra.mxu0 0.0
    %386 = vmatprep.subr.mxu0 0.0
    %387 = vmatpush2.msra.mxu0 0.0
    %388 = vmatprep.subr.mxu0 0.0
    %389 = vmatpush2.msra.mxu0 0.0
    %390 = vmatprep.subr.mxu0 0.0
    %391 = vmatpush2.msra.mxu0 0.0
    %392 = vmatprep.subr.mxu0 0.0
    %393 = vmatpush2.msra.mxu0 0.0
    %394 = vmatprep.subr.mxu0 0.0
    %395 = vmatpush2.msra.mxu0 0.0
    %396 = vmatprep.subr.mxu0 0.0
    %397 = vmatpush2.msra.mxu0 0.0
    %398 = vmatprep.subr.mxu0 0.0
    %399 = vmatpush2.msra.mxu0 0.0
    %400 = vmatprep.subr.mxu0 0.0
    %401 = vmatpush2.msra.mxu0 0.0
    %402 = vmatprep.subr.mxu0 0.0
    %403 = vmatpush2.msra.mxu0 0.0
    %404 = vmatprep.subr.mxu0 0.0
    %405 = vmatpush2.msra.mxu0 0.0
    %406 = vmatprep.subr.mxu0 0.0
    %407 = vmatpush2.msra.mxu0 0.0
    %408 = vmatprep.mubr.f32.mxu0 0.0
    %409 = vmatmul.mubr.f32.gmra.mxu0 %v339
    %v410 = vpop.f32.mrf.mxu0
    %v411 = vadd.f32 %v343, %v410
    %v412 = vpop.f32.mrf.mxu0
    %413 = vdwg.mxu0
    %v414 = vmax.f32 %v411, 0.0
    %s415 = scalar_lea.vmem [#allocation3], 24
    %416 = vst [vmem:[%s415] sm:$0xff] %v414
    %s417 = scalar_lea.vmem [#allocation5], 32
    %v418 = vld [vmem:[%s417] sm:$0xff]
    %419 = vmatprep.subr.mxu0 0.0
    %420 = vmatpush1.msra.mxu0 %v117
    %421 = vmatprep.subr.mxu0 0.0
    %422 = vmatpush1.msra.mxu0 %v116
    %423 = vmatprep.subr.mxu0 0.0
    %424 = vmatpush1.msra.mxu0 %v115
    %425 = vmatprep.subr.mxu0 0.0
    %426 = vmatpush1.msra.mxu0 %v114
    %427 = vmatprep.subr.mxu0 0.0
    %428 = vmatpush1.msra.mxu0 %v113
    %429 = vmatprep.subr.mxu0 0.0
    %430 = vmatpush1.msra.mxu0 %v112
    %431 = vmatprep.subr.mxu0 0.0
    %432 = vmatpush1.msra.mxu0 %v111
    %433 = vmatprep.subr.mxu0 0.0
    %434 = vmatpush1.msra.mxu0 %v110
    %435 = vmatprep.subr.mxu0 0.0
    %436 = vmatpush1.msra.mxu0 %v109
    %437 = vmatprep.subr.mxu0 0.0
    %438 = vmatpush1.msra.mxu0 %v108
    %439 = vmatprep.subr.mxu0 0.0
    %440 = vmatpush1.msra.mxu0 %v107
    %441 = vmatprep.subr.mxu0 0.0
    %442 = vmatpush1.msra.mxu0 %v106
    %443 = vmatprep.subr.mxu0 0.0
    %444 = vmatpush1.msra.mxu0 %v105
    %445 = vmatprep.subr.mxu0 0.0
    %446 = vmatpush1.msra.mxu0 %v104
    %447 = vmatprep.subr.mxu0 0.0
    %448 = vmatpush1.msra.mxu0 %v103
    %449 = vmatprep.subr.mxu0 0.0
    %450 = vmatpush1.msra.mxu0 %v102
    %451 = vmatprep.subr.mxu0 0.0
    %452 = vmatpush2.msra.mxu0 0.0
    %453 = vmatprep.subr.mxu0 0.0
    %454 = vmatpush2.msra.mxu0 0.0
    %455 = vmatprep.subr.mxu0 0.0
    %456 = vmatpush2.msra.mxu0 0.0
    %457 = vmatprep.subr.mxu0 0.0
    %458 = vmatpush2.msra.mxu0 0.0
    %459 = vmatprep.subr.mxu0 0.0
    %460 = vmatpush2.msra.mxu0 0.0
    %461 = vmatprep.subr.mxu0 0.0
    %462 = vmatpush2.msra.mxu0 0.0
    %463 = vmatprep.subr.mxu0 0.0
    %464 = vmatpush2.msra.mxu0 0.0
    %465 = vmatprep.subr.mxu0 0.0
    %466 = vmatpush2.msra.mxu0 0.0
    %467 = vmatprep.subr.mxu0 0.0
    %468 = vmatpush2.msra.mxu0 0.0
    %469 = vmatprep.subr.mxu0 0.0
    %470 = vmatpush2.msra.mxu0 0.0
    %471 = vmatprep.subr.mxu0 0.0
    %472 = vmatpush2.msra.mxu0 0.0
    %473 = vmatprep.subr.mxu0 0.0
    %474 = vmatpush2.msra.mxu0 0.0
    %475 = vmatprep.subr.mxu0 0.0
    %476 = vmatpush2.msra.mxu0 0.0
    %477 = vmatprep.subr.mxu0 0.0
    %478 = vmatpush2.msra.mxu0 0.0
    %479 = vmatprep.subr.mxu0 0.0
    %480 = vmatpush2.msra.mxu0 0.0
    %481 = vmatprep.subr.mxu0 0.0
    %482 = vmatpush2.msra.mxu0 0.0
    %483 = vmatprep.mubr.f32.mxu0 0.0
    %484 = vmatmul.mubr.f32.gmra.mxu0 %v414
    %v485 = vpop.f32.mrf.mxu0
    %v486 = vadd.f32 %v418, %v485
    %v487 = vpop.f32.mrf.mxu0
    %488 = vdwg.mxu0
    %v489 = vmax.f32 %v486, 0.0
    %s490 = scalar_lea.vmem [#allocation3], 32
    %491 = vst [vmem:[%s490] sm:$0xff] %v489
    %s492 = scalar_lea.vmem [#allocation5], 40
    %v493 = vld [vmem:[%s492] sm:$0xff]
    %494 = vmatprep.subr.mxu0 0.0
    %495 = vmatpush1.msra.mxu0 %v117
    %496 = vmatprep.subr.mxu0 0.0
    %497 = vmatpush1.msra.mxu0 %v116
    %498 = vmatprep.subr.mxu0 0.0
    %499 = vmatpush1.msra.mxu0 %v115
    %500 = vmatprep.subr.mxu0 0.0
    %501 = vmatpush1.msra.mxu0 %v114
    %502 = vmatprep.subr.mxu0 0.0
    %503 = vmatpush1.msra.mxu0 %v113
    %504 = vmatprep.subr.mxu0 0.0
    %505 = vmatpush1.msra.mxu0 %v112
    %506 = vmatprep.subr.mxu0 0.0
    %507 = vmatpush1.msra.mxu0 %v111
    %508 = vmatprep.subr.mxu0 0.0
    %509 = vmatpush1.msra.mxu0 %v110
    %510 = vmatprep.subr.mxu0 0.0
    %511 = vmatpush1.msra.mxu0 %v109
    %512 = vmatprep.subr.mxu0 0.0
    %513 = vmatpush1.msra.mxu0 %v108
    %514 = vmatprep.subr.mxu0 0.0
    %515 = vmatpush1.msra.mxu0 %v107
    %516 = vmatprep.subr.mxu0 0.0
    %517 = vmatpush1.msra.mxu0 %v106
    %518 = vmatprep.subr.mxu0 0.0
    %519 = vmatpush1.msra.mxu0 %v105
    %520 = vmatprep.subr.mxu0 0.0
    %521 = vmatpush1.msra.mxu0 %v104
    %522 = vmatprep.subr.mxu0 0.0
    %523 = vmatpush1.msra.mxu0 %v103
    %524 = vmatprep.subr.mxu0 0.0
    %525 = vmatpush1.msra.mxu0 %v102
    %526 = vmatprep.subr.mxu0 0.0
    %527 = vmatpush2.msra.mxu0 0.0
    %528 = vmatprep.subr.mxu0 0.0
    %529 = vmatpush2.msra.mxu0 0.0
    %530 = vmatprep.subr.mxu0 0.0
    %531 = vmatpush2.msra.mxu0 0.0
    %532 = vmatprep.subr.mxu0 0.0
    %533 = vmatpush2.msra.mxu0 0.0
    %534 = vmatprep.subr.mxu0 0.0
    %535 = vmatpush2.msra.mxu0 0.0
    %536 = vmatprep.subr.mxu0 0.0
    %537 = vmatpush2.msra.mxu0 0.0
    %538 = vmatprep.subr.mxu0 0.0
    %539 = vmatpush2.msra.mxu0 0.0
    %540 = vmatprep.subr.mxu0 0.0
    %541 = vmatpush2.msra.mxu0 0.0
    %542 = vmatprep.subr.mxu0 0.0
    %543 = vmatpush2.msra.mxu0 0.0
    %544 = vmatprep.subr.mxu0 0.0
    %545 = vmatpush2.msra.mxu0 0.0
    %546 = vmatprep.subr.mxu0 0.0
    %547 = vmatpush2.msra.mxu0 0.0
    %548 = vmatprep.subr.mxu0 0.0
    %549 = vmatpush2.msra.mxu0 0.0
    %550 = vmatprep.subr.mxu0 0.0
    %551 = vmatpush2.msra.mxu0 0.0
    %552 = vmatprep.subr.mxu0 0.0
    %553 = vmatpush2.msra.mxu0 0.0
    %554 = vmatprep.subr.mxu0 0.0
    %555 = vmatpush2.msra.mxu0 0.0
    %556 = vmatprep.subr.mxu0 0.0
    %557 = vmatpush2.msra.mxu0 0.0
    %558 = vmatprep.mubr.f32.mxu0 0.0
    %559 = vmatmul.mubr.f32.gmra.mxu0 %v489
    %v560 = vpop.f32.mrf.mxu0
    %v561 = vadd.f32 %v493, %v560
    %v562 = vpop.f32.mrf.mxu0
    %563 = vdwg.mxu0
    %v564 = vmax.f32 %v561, 0.0
    %s565 = scalar_lea.vmem [#allocation3], 40
    %566 = vst [vmem:[%s565] sm:$0xff] %v564
    %s567 = scalar_lea.vmem [#allocation5], 48
    %v568 = vld [vmem:[%s567] sm:$0xff]
    %569 = vmatprep.subr.mxu0 0.0
    %570 = vmatpush1.msra.mxu0 %v117
    %571 = vmatprep.subr.mxu0 0.0
    %572 = vmatpush1.msra.mxu0 %v116
    %573 = vmatprep.subr.mxu0 0.0
    %574 = vmatpush1.msra.mxu0 %v115
    %575 = vmatprep.subr.mxu0 0.0
    %576 = vmatpush1.msra.mxu0 %v114
    %577 = vmatprep.subr.mxu0 0.0
    %578 = vmatpush1.msra.mxu0 %v113
    %579 = vmatprep.subr.mxu0 0.0
    %580 = vmatpush1.msra.mxu0 %v112
    %581 = vmatprep.subr.mxu0 0.0
    %582 = vmatpush1.msra.mxu0 %v111
    %583 = vmatprep.subr.mxu0 0.0
    %584 = vmatpush1.msra.mxu0 %v110
    %585 = vmatprep.subr.mxu0 0.0
    %586 = vmatpush1.msra.mxu0 %v109
    %587 = vmatprep.subr.mxu0 0.0
    %588 = vmatpush1.msra.mxu0 %v108
    %589 = vmatprep.subr.mxu0 0.0
    %590 = vmatpush1.msra.mxu0 %v107
    %591 = vmatprep.subr.mxu0 0.0
    %592 = vmatpush1.msra.mxu0 %v106
    %593 = vmatprep.subr.mxu0 0.0
    %594 = vmatpush1.msra.mxu0 %v105
    %595 = vmatprep.subr.mxu0 0.0
    %596 = vmatpush1.msra.mxu0 %v104
    %597 = vmatprep.subr.mxu0 0.0
    %598 = vmatpush1.msra.mxu0 %v103
    %599 = vmatprep.subr.mxu0 0.0
    %600 = vmatpush1.msra.mxu0 %v102
    %601 = vmatprep.subr.mxu0 0.0
    %602 = vmatpush2.msra.mxu0 0.0
    %603 = vmatprep.subr.mxu0 0.0
    %604 = vmatpush2.msra.mxu0 0.0
    %605 = vmatprep.subr.mxu0 0.0
    %606 = vmatpush2.msra.mxu0 0.0
    %607 = vmatprep.subr.mxu0 0.0
    %608 = vmatpush2.msra.mxu0 0.0
    %609 = vmatprep.subr.mxu0 0.0
    %610 = vmatpush2.msra.mxu0 0.0
    %611 = vmatprep.subr.mxu0 0.0
    %612 = vmatpush2.msra.mxu0 0.0
    %613 = vmatprep.subr.mxu0 0.0
    %614 = vmatpush2.msra.mxu0 0.0
    %615 = vmatprep.subr.mxu0 0.0
    %616 = vmatpush2.msra.mxu0 0.0
    %617 = vmatprep.subr.mxu0 0.0
    %618 = vmatpush2.msra.mxu0 0.0
    %619 = vmatprep.subr.mxu0 0.0
    %620 = vmatpush2.msra.mxu0 0.0
    %621 = vmatprep.subr.mxu0 0.0
    %622 = vmatpush2.msra.mxu0 0.0
    %623 = vmatprep.subr.mxu0 0.0
    %624 = vmatpush2.msra.mxu0 0.0
    %625 = vmatprep.subr.mxu0 0.0
    %626 = vmatpush2.msra.mxu0 0.0
    %627 = vmatprep.subr.mxu0 0.0
    %628 = vmatpush2.msra.mxu0 0.0
    %629 = vmatprep.subr.mxu0 0.0
    %630 = vmatpush2.msra.mxu0 0.0
    %631 = vmatprep.subr.mxu0 0.0
    %632 = vmatpush2.msra.mxu0 0.0
    %633 = vmatprep.mubr.f32.mxu0 0.0
    %634 = vmatmul.mubr.f32.gmra.mxu0 %v564
    %v635 = vpop.f32.mrf.mxu0
    %v636 = vadd.f32 %v568, %v635
    %v637 = vpop.f32.mrf.mxu0
    %638 = vdwg.mxu0
    %v639 = vmax.f32 %v636, 0.0
    %s640 = scalar_lea.vmem [#allocation3], 48
    %641 = vst [vmem:[%s640] sm:$0xff] %v639
    %s642 = scalar_lea.vmem [#allocation5], 56
    %v643 = vld [vmem:[%s642] sm:$0xff]
    %644 = vmatprep.subr.mxu0 0.0
    %645 = vmatpush1.msra.mxu0 %v117
    %646 = vmatprep.subr.mxu0 0.0
    %647 = vmatpush1.msra.mxu0 %v116
    %648 = vmatprep.subr.mxu0 0.0
    %649 = vmatpush1.msra.mxu0 %v115
    %650 = vmatprep.subr.mxu0 0.0
    %651 = vmatpush1.msra.mxu0 %v114
    %652 = vmatprep.subr.mxu0 0.0
    %653 = vmatpush1.msra.mxu0 %v113
    %654 = vmatprep.subr.mxu0 0.0
    %655 = vmatpush1.msra.mxu0 %v112
    %656 = vmatprep.subr.mxu0 0.0
    %657 = vmatpush1.msra.mxu0 %v111
    %658 = vmatprep.subr.mxu0 0.0
    %659 = vmatpush1.msra.mxu0 %v110
    %660 = vmatprep.subr.mxu0 0.0
    %661 = vmatpush1.msra.mxu0 %v109
    %662 = vmatprep.subr.mxu0 0.0
    %663 = vmatpush1.msra.mxu0 %v108
    %664 = vmatprep.subr.mxu0 0.0
    %665 = vmatpush1.msra.mxu0 %v107
    %666 = vmatprep.subr.mxu0 0.0
    %667 = vmatpush1.msra.mxu0 %v106
    %668 = vmatprep.subr.mxu0 0.0
    %669 = vmatpush1.msra.mxu0 %v105
    %670 = vmatprep.subr.mxu0 0.0
    %671 = vmatpush1.msra.mxu0 %v104
    %672 = vmatprep.subr.mxu0 0.0
    %673 = vmatpush1.msra.mxu0 %v103
    %674 = vmatprep.subr.mxu0 0.0
    %675 = vmatpush1.msra.mxu0 %v102
    %676 = vmatprep.subr.mxu0 0.0
    %677 = vmatpush2.msra.mxu0 0.0
    %678 = vmatprep.subr.mxu0 0.0
    %679 = vmatpush2.msra.mxu0 0.0
    %680 = vmatprep.subr.mxu0 0.0
    %681 = vmatpush2.msra.mxu0 0.0
    %682 = vmatprep.subr.mxu0 0.0
    %683 = vmatpush2.msra.mxu0 0.0
    %684 = vmatprep.subr.mxu0 0.0
    %685 = vmatpush2.msra.mxu0 0.0
    %686 = vmatprep.subr.mxu0 0.0
    %687 = vmatpush2.msra.mxu0 0.0
    %688 = vmatprep.subr.mxu0 0.0
    %689 = vmatpush2.msra.mxu0 0.0
    %690 = vmatprep.subr.mxu0 0.0
    %691 = vmatpush2.msra.mxu0 0.0
    %692 = vmatprep.subr.mxu0 0.0
    %693 = vmatpush2.msra.mxu0 0.0
    %694 = vmatprep.subr.mxu0 0.0
    %695 = vmatpush2.msra.mxu0 0.0
    %696 = vmatprep.subr.mxu0 0.0
    %697 = vmatpush2.msra.mxu0 0.0
    %698 = vmatprep.subr.mxu0 0.0
    %699 = vmatpush2.msra.mxu0 0.0
    %700 = vmatprep.subr.mxu0 0.0
    %701 = vmatpush2.msra.mxu0 0.0
    %702 = vmatprep.subr.mxu0 0.0
    %703 = vmatpush2.msra.mxu0 0.0
    %704 = vmatprep.subr.mxu0 0.0
    %705 = vmatpush2.msra.mxu0 0.0
    %706 = vmatprep.subr.mxu0 0.0
    %707 = vmatpush2.msra.mxu0 0.0
    %708 = vmatprep.mubr.f32.mxu0 0.0
    %709 = vmatmul.mubr.f32.gmra.mxu0 %v639
    %v710 = vpop.f32.mrf.mxu0
    %v711 = vadd.f32 %v643, %v710
    %v712 = vpop.f32.mrf.mxu0
    %713 = vdwg.mxu0
    %v714 = vmax.f32 %v711, 0.0
    %s715 = scalar_lea.vmem [#allocation3], 56
    %716 = vst [vmem:[%s715] sm:$0xff] %v714
    %717 = vst [vmem:[#allocation4] sm:$0xff] %v714
    %v718 = vld [vmem:[#allocation11] sm:$0xff]
    %v719 = vld [vmem:[#allocation11 + $0x8] sm:$0xff]
    %v720 = vld [vmem:[#allocation11 + $0x10] sm:$0xff]
    %v721 = vld [vmem:[#allocation11 + $0x18] sm:$0xff]
    %v722 = vld [vmem:[#allocation11 + $0x20] sm:$0xff]
    %v723 = vld [vmem:[#allocation11 + $0x28] sm:$0xff]
    %v724 = vld [vmem:[#allocation11 + $0x30] sm:$0xff]
    %v725 = vld [vmem:[#allocation11 + $0x38] sm:$0xff]
    %v726 = vld [vmem:[#allocation11 + $0x40] sm:$0xff]
    %v727 = vld [vmem:[#allocation11 + $0x48] sm:$0xff]
    %v728 = vld [vmem:[#allocation11 + $0x50] sm:$0xff]
    %v729 = vld [vmem:[#allocation11 + $0x58] sm:$0xff]
    %v730 = vld [vmem:[#allocation11 + $0x60] sm:$0xff]
    %v731 = vld [vmem:[#allocation11 + $0x68] sm:$0xff]
    %v732 = vld [vmem:[#allocation11 + $0x70] sm:$0xff]
    %v733 = vld [vmem:[#allocation11 + $0x78] sm:$0xff]
    %v734 = vld [vmem:[#allocation3] sm:$0xff]
    %v735 = vld [vmem:[#allocation3 + $0x8] sm:$0xff]
    %v736 = vld [vmem:[#allocation3 + $0x10] sm:$0xff]
    %v737 = vld [vmem:[#allocation3 + $0x18] sm:$0xff]
    %v738 = vld [vmem:[#allocation3 + $0x20] sm:$0xff]
    %v739 = vld [vmem:[#allocation3 + $0x28] sm:$0xff]
    %v740 = vld [vmem:[#allocation3 + $0x30] sm:$0xff]
    %v741 = vld [vmem:[#allocation3 + $0x38] sm:$0xff]
    %v742 = vld [vmem:[#allocation10] sm:$0xff]
    %v743 = vld [vmem:[#allocation10 + $0x8] sm:$0xff]
    %v744 = vld [vmem:[#allocation10 + $0x10] sm:$0xff]
    %v745 = vld [vmem:[#allocation10 + $0x18] sm:$0xff]
    %v746 = vld [vmem:[#allocation10 + $0x20] sm:$0xff]
    %v747 = vld [vmem:[#allocation10 + $0x28] sm:$0xff]
    %v748 = vld [vmem:[#allocation10 + $0x30] sm:$0xff]
    %v749 = vld [vmem:[#allocation10 + $0x38] sm:$0xff]
    %v750 = vld [vmem:[#allocation10 + $0x40] sm:$0xff]
    %v751 = vld [vmem:[#allocation10 + $0x48] sm:$0xff]
    %v752 = vld [vmem:[#allocation10 + $0x50] sm:$0xff]
    %v753 = vld [vmem:[#allocation10 + $0x58] sm:$0xff]
    %v754 = vld [vmem:[#allocation10 + $0x60] sm:$0xff]
    %v755 = vld [vmem:[#allocation10 + $0x68] sm:$0xff]
    %v756 = vld [vmem:[#allocation10 + $0x70] sm:$0xff]
    %v757 = vld [vmem:[#allocation10 + $0x78] sm:$0xff]
    %v758 = vld [vmem:[%s4] sm:$0x1]
    %v760 = vlaneseq
    %v761 = vshrl.u32 %v760, 7
    %v762 = vsub.s32 0, %v761
    %v763 = vrot.slane %v758, %v762
    %765 = vmatprep.subr.mxu0 0.0
    %766 = vmatpush1.msra.mxu0 %v757
    %767 = vmatprep.subr.mxu0 0.0
    %768 = vmatpush1.msra.mxu0 %v756
    %769 = vmatprep.subr.mxu0 0.0
    %770 = vmatpush1.msra.mxu0 %v755
    %771 = vmatprep.subr.mxu0 0.0
    %772 = vmatpush1.msra.mxu0 %v754
    %773 = vmatprep.subr.mxu0 0.0
    %774 = vmatpush1.msra.mxu0 %v753
    %775 = vmatprep.subr.mxu0 0.0
    %776 = vmatpush1.msra.mxu0 %v752
    %777 = vmatprep.subr.mxu0 0.0
    %778 = vmatpush1.msra.mxu0 %v751
    %779 = vmatprep.subr.mxu0 0.0
    %780 = vmatpush1.msra.mxu0 %v750
    %781 = vmatprep.subr.mxu0 0.0
    %782 = vmatpush1.msra.mxu0 %v749
    %783 = vmatprep.subr.mxu0 0.0
    %784 = vmatpush1.msra.mxu0 %v748
    %785 = vmatprep.subr.mxu0 0.0
    %786 = vmatpush1.msra.mxu0 %v747
    %787 = vmatprep.subr.mxu0 0.0
    %788 = vmatpush1.msra.mxu0 %v746
    %789 = vmatprep.subr.mxu0 0.0
    %790 = vmatpush1.msra.mxu0 %v745
    %791 = vmatprep.subr.mxu0 0.0
    %792 = vmatpush1.msra.mxu0 %v744
    %793 = vmatprep.subr.mxu0 0.0
    %794 = vmatpush1.msra.mxu0 %v743
    %795 = vmatprep.subr.mxu0 0.0
    %796 = vmatpush1.msra.mxu0 %v742
    %797 = vmatprep.subr.mxu0 0.0
    %798 = vmatpush2.msra.mxu0 0.0
    %799 = vmatprep.subr.mxu0 0.0
    %800 = vmatpush2.msra.mxu0 0.0
    %801 = vmatprep.subr.mxu0 0.0
    %802 = vmatpush2.msra.mxu0 0.0
    %803 = vmatprep.subr.mxu0 0.0
    %804 = vmatpush2.msra.mxu0 0.0
    %805 = vmatprep.subr.mxu0 0.0
    %806 = vmatpush2.msra.mxu0 0.0
    %807 = vmatprep.subr.mxu0 0.0
    %808 = vmatpush2.msra.mxu0 0.0
    %809 = vmatprep.subr.mxu0 0.0
    %810 = vmatpush2.msra.mxu0 0.0
    %811 = vmatprep.subr.mxu0 0.0
    %812 = vmatpush2.msra.mxu0 0.0
    %813 = vmatprep.subr.mxu0 0.0
    %814 = vmatpush2.msra.mxu0 0.0
    %815 = vmatprep.subr.mxu0 0.0
    %816 = vmatpush2.msra.mxu0 0.0
    %817 = vmatprep.subr.mxu0 0.0
    %818 = vmatpush2.msra.mxu0 0.0
    %819 = vmatprep.subr.mxu0 0.0
    %820 = vmatpush2.msra.mxu0 0.0
    %821 = vmatprep.subr.mxu0 0.0
    %822 = vmatpush2.msra.mxu0 0.0
    %823 = vmatprep.subr.mxu0 0.0
    %824 = vmatpush2.msra.mxu0 0.0
    %825 = vmatprep.subr.mxu0 0.0
    %826 = vmatpush2.msra.mxu0 0.0
    %827 = vmatprep.subr.mxu0 0.0
    %828 = vmatpush2.msra.mxu0 0.0
    %829 = vmatprep.mubr.f32.mxu0 0.0
    %830 = vmatmul.mubr.f32.gmra.mxu0 %v734
    %v831 = vpop.f32.mrf.mxu0
    %v832 = vadd.f32 %v763, %v831
    %v833 = vpop.f32.mrf.mxu0
    %834 = vmatprep.mubr.f32.mxu0 0.0
    %835 = vmatmul.mubr.f32.gmra.mxu0 %v735
    %v836 = vpop.f32.mrf.mxu0
    %v837 = vadd.f32 %v763, %v836
    %v838 = vpop.f32.mrf.mxu0
    %839 = vmatprep.mubr.f32.mxu0 0.0
    %840 = vmatmul.mubr.f32.gmra.mxu0 %v736
    %v841 = vpop.f32.mrf.mxu0
    %v842 = vadd.f32 %v763, %v841
    %v843 = vpop.f32.mrf.mxu0
    %844 = vmatprep.mubr.f32.mxu0 0.0
    %845 = vmatmul.mubr.f32.gmra.mxu0 %v737
    %v846 = vpop.f32.mrf.mxu0
    %v847 = vadd.f32 %v763, %v846
    %v848 = vpop.f32.mrf.mxu0
    %849 = vmatprep.mubr.f32.mxu0 0.0
    %850 = vmatmul.mubr.f32.gmra.mxu0 %v738
    %v851 = vpop.f32.mrf.mxu0
    %v852 = vadd.f32 %v763, %v851
    %v853 = vpop.f32.mrf.mxu0
    %854 = vmatprep.mubr.f32.mxu0 0.0
    %855 = vmatmul.mubr.f32.gmra.mxu0 %v739
    %v856 = vpop.f32.mrf.mxu0
    %v857 = vadd.f32 %v763, %v856
    %v858 = vpop.f32.mrf.mxu0
    %859 = vmatprep.mubr.f32.mxu0 0.0
    %860 = vmatmul.mubr.f32.gmra.mxu0 %v740
    %v861 = vpop.f32.mrf.mxu0
    %v862 = vadd.f32 %v763, %v861
    %v863 = vpop.f32.mrf.mxu0
    %864 = vmatprep.mubr.f32.mxu0 0.0
    %865 = vmatmul.mubr.f32.gmra.mxu0 %v741
    %v866 = vpop.f32.mrf.mxu0
    %v867 = vadd.f32 %v763, %v866
    %v868 = vpop.f32.mrf.mxu0
    %869 = vdwg.mxu0
    %870 = vst [vmem:[#allocation2] sm:$0xff] %v832
    %871 = vst [vmem:[#allocation2 + $0x8] sm:$0xff] %v837
    %872 = vst [vmem:[#allocation2 + $0x10] sm:$0xff] %v842
    %873 = vst [vmem:[#allocation2 + $0x18] sm:$0xff] %v847
    %874 = vst [vmem:[#allocation2 + $0x20] sm:$0xff] %v852
    %875 = vst [vmem:[#allocation2 + $0x28] sm:$0xff] %v857
    %876 = vst [vmem:[#allocation2 + $0x30] sm:$0xff] %v862
    %877 = vst [vmem:[#allocation2 + $0x38] sm:$0xff] %v867
    %s878 = scalar_lea.vmem [#allocation4], 8
    %v879 = vld [vmem:[%s878] sm:$0xff]
    %v880 = vld [vmem:[#allocation2] sm:$0xff]
    %881 = vmatprep.subr.mxu0 0.0
    %882 = vmatpush1.msra.mxu0 %v733
    %883 = vmatprep.subr.mxu0 0.0
    %884 = vmatpush1.msra.mxu0 %v732
    %885 = vmatprep.subr.mxu0 0.0
    %886 = vmatpush1.msra.mxu0 %v731
    %887 = vmatprep.subr.mxu0 0.0
    %888 = vmatpush1.msra.mxu0 %v730
    %889 = vmatprep.subr.mxu0 0.0
    %890 = vmatpush1.msra.mxu0 %v729
    %891 = vmatprep.subr.mxu0 0.0
    %892 = vmatpush1.msra.mxu0 %v728
    %893 = vmatprep.subr.mxu0 0.0
    %894 = vmatpush1.msra.mxu0 %v727
    %895 = vmatprep.subr.mxu0 0.0
    %896 = vmatpush1.msra.mxu0 %v726
    %897 = vmatprep.subr.mxu0 0.0
    %898 = vmatpush1.msra.mxu0 %v725
    %899 = vmatprep.subr.mxu0 0.0
    %900 = vmatpush1.msra.mxu0 %v724
    %901 = vmatprep.subr.mxu0 0.0
    %902 = vmatpush1.msra.mxu0 %v723
    %903 = vmatprep.subr.mxu0 0.0
    %904 = vmatpush1.msra.mxu0 %v722
    %905 = vmatprep.subr.mxu0 0.0
    %906 = vmatpush1.msra.mxu0 %v721
    %907 = vmatprep.subr.mxu0 0.0
    %908 = vmatpush1.msra.mxu0 %v720
    %909 = vmatprep.subr.mxu0 0.0
    %910 = vmatpush1.msra.mxu0 %v719
    %911 = vmatprep.subr.mxu0 0.0
    %912 = vmatpush1.msra.mxu0 %v718
    %913 = vmatprep.subr.mxu0 0.0
    %914 = vmatpush2.msra.mxu0 0.0
    %915 = vmatprep.subr.mxu0 0.0
    %916 = vmatpush2.msra.mxu0 0.0
    %917 = vmatprep.subr.mxu0 0.0
    %918 = vmatpush2.msra.mxu0 0.0
    %919 = vmatprep.subr.mxu0 0.0
    %920 = vmatpush2.msra.mxu0 0.0
    %921 = vmatprep.subr.mxu0 0.0
    %922 = vmatpush2.msra.mxu0 0.0
    %923 = vmatprep.subr.mxu0 0.0
    %924 = vmatpush2.msra.mxu0 0.0
    %925 = vmatprep.subr.mxu0 0.0
    %926 = vmatpush2.msra.mxu0 0.0
    %927 = vmatprep.subr.mxu0 0.0
    %928 = vmatpush2.msra.mxu0 0.0
    %929 = vmatprep.subr.mxu0 0.0
    %930 = vmatpush2.msra.mxu0 0.0
    %931 = vmatprep.subr.mxu0 0.0
    %932 = vmatpush2.msra.mxu0 0.0
    %933 = vmatprep.subr.mxu0 0.0
    %934 = vmatpush2.msra.mxu0 0.0
    %935 = vmatprep.subr.mxu0 0.0
    %936 = vmatpush2.msra.mxu0 0.0
    %937 = vmatprep.subr.mxu0 0.0
    %938 = vmatpush2.msra.mxu0 0.0
    %939 = vmatprep.subr.mxu0 0.0
    %940 = vmatpush2.msra.mxu0 0.0
    %941 = vmatprep.subr.mxu0 0.0
    %942 = vmatpush2.msra.mxu0 0.0
    %943 = vmatprep.subr.mxu0 0.0
    %944 = vmatpush2.msra.mxu0 0.0
    %945 = vmatprep.mubr.f32.mxu0 0.0
    %946 = vmatmul.mubr.f32.gmra.mxu0 %v879
    %v947 = vpop.f32.mrf.mxu0
    %v948 = vadd.f32 %v880, %v947
    %v949 = vpop.f32.mrf.mxu0
    %950 = vdwg.mxu0
    %v951 = vmax.f32 %v948, 0.0
    %s952 = scalar_lea.vmem [#allocation2], 8
    %v953 = vld [vmem:[%s952] sm:$0xff]
    %954 = vmatprep.subr.mxu0 0.0
    %955 = vmatpush1.msra.mxu0 %v733
    %956 = vmatprep.subr.mxu0 0.0
    %957 = vmatpush1.msra.mxu0 %v732
    %958 = vmatprep.subr.mxu0 0.0
    %959 = vmatpush1.msra.mxu0 %v731
    %960 = vmatprep.subr.mxu0 0.0
    %961 = vmatpush1.msra.mxu0 %v730
    %962 = vmatprep.subr.mxu0 0.0
    %963 = vmatpush1.msra.mxu0 %v729
    %964 = vmatprep.subr.mxu0 0.0
    %965 = vmatpush1.msra.mxu0 %v728
    %966 = vmatprep.subr.mxu0 0.0
    %967 = vmatpush1.msra.mxu0 %v727
    %968 = vmatprep.subr.mxu0 0.0
    %969 = vmatpush1.msra.mxu0 %v726
    %970 = vmatprep.subr.mxu0 0.0
    %971 = vmatpush1.msra.mxu0 %v725
    %972 = vmatprep.subr.mxu0 0.0
    %973 = vmatpush1.msra.mxu0 %v724
    %974 = vmatprep.subr.mxu0 0.0
    %975 = vmatpush1.msra.mxu0 %v723
    %976 = vmatprep.subr.mxu0 0.0
    %977 = vmatpush1.msra.mxu0 %v722
    %978 = vmatprep.subr.mxu0 0.0
    %979 = vmatpush1.msra.mxu0 %v721
    %980 = vmatprep.subr.mxu0 0.0
    %981 = vmatpush1.msra.mxu0 %v720
    %982 = vmatprep.subr.mxu0 0.0
    %983 = vmatpush1.msra.mxu0 %v719
    %984 = vmatprep.subr.mxu0 0.0
    %985 = vmatpush1.msra.mxu0 %v718
    %986 = vmatprep.subr.mxu0 0.0
    %987 = vmatpush2.msra.mxu0 0.0
    %988 = vmatprep.subr.mxu0 0.0
    %989 = vmatpush2.msra.mxu0 0.0
    %990 = vmatprep.subr.mxu0 0.0
    %991 = vmatpush2.msra.mxu0 0.0
    %992 = vmatprep.subr.mxu0 0.0
    %993 = vmatpush2.msra.mxu0 0.0
    %994 = vmatprep.subr.mxu0 0.0
    %995 = vmatpush2.msra.mxu0 0.0
    %996 = vmatprep.subr.mxu0 0.0
    %997 = vmatpush2.msra.mxu0 0.0
    %998 = vmatprep.subr.mxu0 0.0
    %999 = vmatpush2.msra.mxu0 0.0
    %1000 = vmatprep.subr.mxu0 0.0
    %1001 = vmatpush2.msra.mxu0 0.0
    %1002 = vmatprep.subr.mxu0 0.0
    %1003 = vmatpush2.msra.mxu0 0.0
    %1004 = vmatprep.subr.mxu0 0.0
    %1005 = vmatpush2.msra.mxu0 0.0
    %1006 = vmatprep.subr.mxu0 0.0
    %1007 = vmatpush2.msra.mxu0 0.0
    %1008 = vmatprep.subr.mxu0 0.0
    %1009 = vmatpush2.msra.mxu0 0.0
    %1010 = vmatprep.subr.mxu0 0.0
    %1011 = vmatpush2.msra.mxu0 0.0
    %1012 = vmatprep.subr.mxu0 0.0
    %1013 = vmatpush2.msra.mxu0 0.0
    %1014 = vmatprep.subr.mxu0 0.0
    %1015 = vmatpush2.msra.mxu0 0.0
    %1016 = vmatprep.subr.mxu0 0.0
    %1017 = vmatpush2.msra.mxu0 0.0
    %1018 = vmatprep.mubr.f32.mxu0 0.0
    %1019 = vmatmul.mubr.f32.gmra.mxu0 %v951
    %v1020 = vpop.f32.mrf.mxu0
    %v1021 = vadd.f32 %v953, %v1020
    %v1022 = vpop.f32.mrf.mxu0
    %1023 = vdwg.mxu0
    %v1024 = vmax.f32 %v1021, 0.0
    %s1025 = scalar_lea.vmem [#allocation2], 16
    %v1026 = vld [vmem:[%s1025] sm:$0xff]
    %1027 = vmatprep.subr.mxu0 0.0
    %1028 = vmatpush1.msra.mxu0 %v733
    %1029 = vmatprep.subr.mxu0 0.0
    %1030 = vmatpush1.msra.mxu0 %v732
    %1031 = vmatprep.subr.mxu0 0.0
    %1032 = vmatpush1.msra.mxu0 %v731
    %1033 = vmatprep.subr.mxu0 0.0
    %1034 = vmatpush1.msra.mxu0 %v730
    %1035 = vmatprep.subr.mxu0 0.0
    %1036 = vmatpush1.msra.mxu0 %v729
    %1037 = vmatprep.subr.mxu0 0.0
    %1038 = vmatpush1.msra.mxu0 %v728
    %1039 = vmatprep.subr.mxu0 0.0
    %1040 = vmatpush1.msra.mxu0 %v727
    %1041 = vmatprep.subr.mxu0 0.0
    %1042 = vmatpush1.msra.mxu0 %v726
    %1043 = vmatprep.subr.mxu0 0.0
    %1044 = vmatpush1.msra.mxu0 %v725
    %1045 = vmatprep.subr.mxu0 0.0
    %1046 = vmatpush1.msra.mxu0 %v724
    %1047 = vmatprep.subr.mxu0 0.0
    %1048 = vmatpush1.msra.mxu0 %v723
    %1049 = vmatprep.subr.mxu0 0.0
    %1050 = vmatpush1.msra.mxu0 %v722
    %1051 = vmatprep.subr.mxu0 0.0
    %1052 = vmatpush1.msra.mxu0 %v721
    %1053 = vmatprep.subr.mxu0 0.0
    %1054 = vmatpush1.msra.mxu0 %v720
    %1055 = vmatprep.subr.mxu0 0.0
    %1056 = vmatpush1.msra.mxu0 %v719
    %1057 = vmatprep.subr.mxu0 0.0
    %1058 = vmatpush1.msra.mxu0 %v718
    %1059 = vmatprep.subr.mxu0 0.0
    %1060 = vmatpush2.msra.mxu0 0.0
    %1061 = vmatprep.subr.mxu0 0.0
    %1062 = vmatpush2.msra.mxu0 0.0
    %1063 = vmatprep.subr.mxu0 0.0
    %1064 = vmatpush2.msra.mxu0 0.0
    %1065 = vmatprep.subr.mxu0 0.0
    %1066 = vmatpush2.msra.mxu0 0.0
    %1067 = vmatprep.subr.mxu0 0.0
    %1068 = vmatpush2.msra.mxu0 0.0
    %1069 = vmatprep.subr.mxu0 0.0
    %1070 = vmatpush2.msra.mxu0 0.0
    %1071 = vmatprep.subr.mxu0 0.0
    %1072 = vmatpush2.msra.mxu0 0.0
    %1073 = vmatprep.subr.mxu0 0.0
    %1074 = vmatpush2.msra.mxu0 0.0
    %1075 = vmatprep.subr.mxu0 0.0
    %1076 = vmatpush2.msra.mxu0 0.0
    %1077 = vmatprep.subr.mxu0 0.0
    %1078 = vmatpush2.msra.mxu0 0.0
    %1079 = vmatprep.subr.mxu0 0.0
    %1080 = vmatpush2.msra.mxu0 0.0
    %1081 = vmatprep.subr.mxu0 0.0
    %1082 = vmatpush2.msra.mxu0 0.0
    %1083 = vmatprep.subr.mxu0 0.0
    %1084 = vmatpush2.msra.mxu0 0.0
    %1085 = vmatprep.subr.mxu0 0.0
    %1086 = vmatpush2.msra.mxu0 0.0
    %1087 = vmatprep.subr.mxu0 0.0
    %1088 = vmatpush2.msra.mxu0 0.0
    %1089 = vmatprep.subr.mxu0 0.0
    %1090 = vmatpush2.msra.mxu0 0.0
    %1091 = vmatprep.mubr.f32.mxu0 0.0
    %1092 = vmatmul.mubr.f32.gmra.mxu0 %v1024
    %v1093 = vpop.f32.mrf.mxu0
    %v1094 = vadd.f32 %v1026, %v1093
    %v1095 = vpop.f32.mrf.mxu0
    %1096 = vdwg.mxu0
    %v1097 = vmax.f32 %v1094, 0.0
    %s1098 = scalar_lea.vmem [#allocation2], 24
    %v1099 = vld [vmem:[%s1098] sm:$0xff]
    %1100 = vmatprep.subr.mxu0 0.0
    %1101 = vmatpush1.msra.mxu0 %v733
    %1102 = vmatprep.subr.mxu0 0.0
    %1103 = vmatpush1.msra.mxu0 %v732
    %1104 = vmatprep.subr.mxu0 0.0
    %1105 = vmatpush1.msra.mxu0 %v731
    %1106 = vmatprep.subr.mxu0 0.0
    %1107 = vmatpush1.msra.mxu0 %v730
    %1108 = vmatprep.subr.mxu0 0.0
    %1109 = vmatpush1.msra.mxu0 %v729
    %1110 = vmatprep.subr.mxu0 0.0
    %1111 = vmatpush1.msra.mxu0 %v728
    %1112 = vmatprep.subr.mxu0 0.0
    %1113 = vmatpush1.msra.mxu0 %v727
    %1114 = vmatprep.subr.mxu0 0.0
    %1115 = vmatpush1.msra.mxu0 %v726
    %1116 = vmatprep.subr.mxu0 0.0
    %1117 = vmatpush1.msra.mxu0 %v725
    %1118 = vmatprep.subr.mxu0 0.0
    %1119 = vmatpush1.msra.mxu0 %v724
    %1120 = vmatprep.subr.mxu0 0.0
    %1121 = vmatpush1.msra.mxu0 %v723
    %1122 = vmatprep.subr.mxu0 0.0
    %1123 = vmatpush1.msra.mxu0 %v722
    %1124 = vmatprep.subr.mxu0 0.0
    %1125 = vmatpush1.msra.mxu0 %v721
    %1126 = vmatprep.subr.mxu0 0.0
    %1127 = vmatpush1.msra.mxu0 %v720
    %1128 = vmatprep.subr.mxu0 0.0
    %1129 = vmatpush1.msra.mxu0 %v719
    %1130 = vmatprep.subr.mxu0 0.0
    %1131 = vmatpush1.msra.mxu0 %v718
    %1132 = vmatprep.subr.mxu0 0.0
    %1133 = vmatpush2.msra.mxu0 0.0
    %1134 = vmatprep.subr.mxu0 0.0
    %1135 = vmatpush2.msra.mxu0 0.0
    %1136 = vmatprep.subr.mxu0 0.0
    %1137 = vmatpush2.msra.mxu0 0.0
    %1138 = vmatprep.subr.mxu0 0.0
    %1139 = vmatpush2.msra.mxu0 0.0
    %1140 = vmatprep.subr.mxu0 0.0
    %1141 = vmatpush2.msra.mxu0 0.0
    %1142 = vmatprep.subr.mxu0 0.0
    %1143 = vmatpush2.msra.mxu0 0.0
    %1144 = vmatprep.subr.mxu0 0.0
    %1145 = vmatpush2.msra.mxu0 0.0
    %1146 = vmatprep.subr.mxu0 0.0
    %1147 = vmatpush2.msra.mxu0 0.0
    %1148 = vmatprep.subr.mxu0 0.0
    %1149 = vmatpush2.msra.mxu0 0.0
    %1150 = vmatprep.subr.mxu0 0.0
    %1151 = vmatpush2.msra.mxu0 0.0
    %1152 = vmatprep.subr.mxu0 0.0
    %1153 = vmatpush2.msra.mxu0 0.0
    %1154 = vmatprep.subr.mxu0 0.0
    %1155 = vmatpush2.msra.mxu0 0.0
    %1156 = vmatprep.subr.mxu0 0.0
    %1157 = vmatpush2.msra.mxu0 0.0
    %1158 = vmatprep.subr.mxu0 0.0
    %1159 = vmatpush2.msra.mxu0 0.0
    %1160 = vmatprep.subr.mxu0 0.0
    %1161 = vmatpush2.msra.mxu0 0.0
    %1162 = vmatprep.subr.mxu0 0.0
    %1163 = vmatpush2.msra.mxu0 0.0
    %1164 = vmatprep.mubr.f32.mxu0 0.0
    %1165 = vmatmul.mubr.f32.gmra.mxu0 %v1097
    %v1166 = vpop.f32.mrf.mxu0
    %v1167 = vadd.f32 %v1099, %v1166
    %v1168 = vpop.f32.mrf.mxu0
    %1169 = vdwg.mxu0
    %v1170 = vmax.f32 %v1167, 0.0
    %s1171 = scalar_lea.vmem [#allocation2], 32
    %v1172 = vld [vmem:[%s1171] sm:$0xff]
    %1173 = vmatprep.subr.mxu0 0.0
    %1174 = vmatpush1.msra.mxu0 %v733
    %1175 = vmatprep.subr.mxu0 0.0
    %1176 = vmatpush1.msra.mxu0 %v732
    %1177 = vmatprep.subr.mxu0 0.0
    %1178 = vmatpush1.msra.mxu0 %v731
    %1179 = vmatprep.subr.mxu0 0.0
    %1180 = vmatpush1.msra.mxu0 %v730
    %1181 = vmatprep.subr.mxu0 0.0
    %1182 = vmatpush1.msra.mxu0 %v729
    %1183 = vmatprep.subr.mxu0 0.0
    %1184 = vmatpush1.msra.mxu0 %v728
    %1185 = vmatprep.subr.mxu0 0.0
    %1186 = vmatpush1.msra.mxu0 %v727
    %1187 = vmatprep.subr.mxu0 0.0
    %1188 = vmatpush1.msra.mxu0 %v726
    %1189 = vmatprep.subr.mxu0 0.0
    %1190 = vmatpush1.msra.mxu0 %v725
    %1191 = vmatprep.subr.mxu0 0.0
    %1192 = vmatpush1.msra.mxu0 %v724
    %1193 = vmatprep.subr.mxu0 0.0
    %1194 = vmatpush1.msra.mxu0 %v723
    %1195 = vmatprep.subr.mxu0 0.0
    %1196 = vmatpush1.msra.mxu0 %v722
    %1197 = vmatprep.subr.mxu0 0.0
    %1198 = vmatpush1.msra.mxu0 %v721
    %1199 = vmatprep.subr.mxu0 0.0
    %1200 = vmatpush1.msra.mxu0 %v720
    %1201 = vmatprep.subr.mxu0 0.0
    %1202 = vmatpush1.msra.mxu0 %v719
    %1203 = vmatprep.subr.mxu0 0.0
    %1204 = vmatpush1.msra.mxu0 %v718
    %1205 = vmatprep.subr.mxu0 0.0
    %1206 = vmatpush2.msra.mxu0 0.0
    %1207 = vmatprep.subr.mxu0 0.0
    %1208 = vmatpush2.msra.mxu0 0.0
    %1209 = vmatprep.subr.mxu0 0.0
    %1210 = vmatpush2.msra.mxu0 0.0
    %1211 = vmatprep.subr.mxu0 0.0
    %1212 = vmatpush2.msra.mxu0 0.0
    %1213 = vmatprep.subr.mxu0 0.0
    %1214 = vmatpush2.msra.mxu0 0.0
    %1215 = vmatprep.subr.mxu0 0.0
    %1216 = vmatpush2.msra.mxu0 0.0
    %1217 = vmatprep.subr.mxu0 0.0
    %1218 = vmatpush2.msra.mxu0 0.0
    %1219 = vmatprep.subr.mxu0 0.0
    %1220 = vmatpush2.msra.mxu0 0.0
    %1221 = vmatprep.subr.mxu0 0.0
    %1222 = vmatpush2.msra.mxu0 0.0
    %1223 = vmatprep.subr.mxu0 0.0
    %1224 = vmatpush2.msra.mxu0 0.0
    %1225 = vmatprep.subr.mxu0 0.0
    %1226 = vmatpush2.msra.mxu0 0.0
    %1227 = vmatprep.subr.mxu0 0.0
    %1228 = vmatpush2.msra.mxu0 0.0
    %1229 = vmatprep.subr.mxu0 0.0
    %1230 = vmatpush2.msra.mxu0 0.0
    %1231 = vmatprep.subr.mxu0 0.0
    %1232 = vmatpush2.msra.mxu0 0.0
    %1233 = vmatprep.subr.mxu0 0.0
    %1234 = vmatpush2.msra.mxu0 0.0
    %1235 = vmatprep.subr.mxu0 0.0
    %1236 = vmatpush2.msra.mxu0 0.0
    %1237 = vmatprep.mubr.f32.mxu0 0.0
    %1238 = vmatmul.mubr.f32.gmra.mxu0 %v1170
    %v1239 = vpop.f32.mrf.mxu0
    %v1240 = vadd.f32 %v1172, %v1239
    %v1241 = vpop.f32.mrf.mxu0
    %1242 = vdwg.mxu0
    %v1243 = vmax.f32 %v1240, 0.0
    %s1244 = scalar_lea.vmem [#allocation2], 40
    %v1245 = vld [vmem:[%s1244] sm:$0xff]
    %1246 = vmatprep.subr.mxu0 0.0
    %1247 = vmatpush1.msra.mxu0 %v733
    %1248 = vmatprep.subr.mxu0 0.0
    %1249 = vmatpush1.msra.mxu0 %v732
    %1250 = vmatprep.subr.mxu0 0.0
    %1251 = vmatpush1.msra.mxu0 %v731
    %1252 = vmatprep.subr.mxu0 0.0
    %1253 = vmatpush1.msra.mxu0 %v730
    %1254 = vmatprep.subr.mxu0 0.0
    %1255 = vmatpush1.msra.mxu0 %v729
    %1256 = vmatprep.subr.mxu0 0.0
    %1257 = vmatpush1.msra.mxu0 %v728
    %1258 = vmatprep.subr.mxu0 0.0
    %1259 = vmatpush1.msra.mxu0 %v727
    %1260 = vmatprep.subr.mxu0 0.0
    %1261 = vmatpush1.msra.mxu0 %v726
    %1262 = vmatprep.subr.mxu0 0.0
    %1263 = vmatpush1.msra.mxu0 %v725
    %1264 = vmatprep.subr.mxu0 0.0
    %1265 = vmatpush1.msra.mxu0 %v724
    %1266 = vmatprep.subr.mxu0 0.0
    %1267 = vmatpush1.msra.mxu0 %v723
    %1268 = vmatprep.subr.mxu0 0.0
    %1269 = vmatpush1.msra.mxu0 %v722
    %1270 = vmatprep.subr.mxu0 0.0
    %1271 = vmatpush1.msra.mxu0 %v721
    %1272 = vmatprep.subr.mxu0 0.0
    %1273 = vmatpush1.msra.mxu0 %v720
    %1274 = vmatprep.subr.mxu0 0.0
    %1275 = vmatpush1.msra.mxu0 %v719
    %1276 = vmatprep.subr.mxu0 0.0
    %1277 = vmatpush1.msra.mxu0 %v718
    %1278 = vmatprep.subr.mxu0 0.0
    %1279 = vmatpush2.msra.mxu0 0.0
    %1280 = vmatprep.subr.mxu0 0.0
    %1281 = vmatpush2.msra.mxu0 0.0
    %1282 = vmatprep.subr.mxu0 0.0
    %1283 = vmatpush2.msra.mxu0 0.0
    %1284 = vmatprep.subr.mxu0 0.0
    %1285 = vmatpush2.msra.mxu0 0.0
    %1286 = vmatprep.subr.mxu0 0.0
    %1287 = vmatpush2.msra.mxu0 0.0
    %1288 = vmatprep.subr.mxu0 0.0
    %1289 = vmatpush2.msra.mxu0 0.0
    %1290 = vmatprep.subr.mxu0 0.0
    %1291 = vmatpush2.msra.mxu0 0.0
    %1292 = vmatprep.subr.mxu0 0.0
    %1293 = vmatpush2.msra.mxu0 0.0
    %1294 = vmatprep.subr.mxu0 0.0
    %1295 = vmatpush2.msra.mxu0 0.0
    %1296 = vmatprep.subr.mxu0 0.0
    %1297 = vmatpush2.msra.mxu0 0.0
    %1298 = vmatprep.subr.mxu0 0.0
    %1299 = vmatpush2.msra.mxu0 0.0
    %1300 = vmatprep.subr.mxu0 0.0
    %1301 = vmatpush2.msra.mxu0 0.0
    %1302 = vmatprep.subr.mxu0 0.0
    %1303 = vmatpush2.msra.mxu0 0.0
    %1304 = vmatprep.subr.mxu0 0.0
    %1305 = vmatpush2.msra.mxu0 0.0
    %1306 = vmatprep.subr.mxu0 0.0
    %1307 = vmatpush2.msra.mxu0 0.0
    %1308 = vmatprep.subr.mxu0 0.0
    %1309 = vmatpush2.msra.mxu0 0.0
    %1310 = vmatprep.mubr.f32.mxu0 0.0
    %1311 = vmatmul.mubr.f32.gmra.mxu0 %v1243
    %v1312 = vpop.f32.mrf.mxu0
    %v1313 = vadd.f32 %v1245, %v1312
    %v1314 = vpop.f32.mrf.mxu0
    %1315 = vdwg.mxu0
    %v1316 = vmax.f32 %v1313, 0.0
    %s1317 = scalar_lea.vmem [#allocation2], 48
    %v1318 = vld [vmem:[%s1317] sm:$0xff]
    %1319 = vmatprep.subr.mxu0 0.0
    %1320 = vmatpush1.msra.mxu0 %v733
    %1321 = vmatprep.subr.mxu0 0.0
    %1322 = vmatpush1.msra.mxu0 %v732
    %1323 = vmatprep.subr.mxu0 0.0
    %1324 = vmatpush1.msra.mxu0 %v731
    %1325 = vmatprep.subr.mxu0 0.0
    %1326 = vmatpush1.msra.mxu0 %v730
    %1327 = vmatprep.subr.mxu0 0.0
    %1328 = vmatpush1.msra.mxu0 %v729
    %1329 = vmatprep.subr.mxu0 0.0
    %1330 = vmatpush1.msra.mxu0 %v728
    %1331 = vmatprep.subr.mxu0 0.0
    %1332 = vmatpush1.msra.mxu0 %v727
    %1333 = vmatprep.subr.mxu0 0.0
    %1334 = vmatpush1.msra.mxu0 %v726
    %1335 = vmatprep.subr.mxu0 0.0
    %1336 = vmatpush1.msra.mxu0 %v725
    %1337 = vmatprep.subr.mxu0 0.0
    %1338 = vmatpush1.msra.mxu0 %v724
    %1339 = vmatprep.subr.mxu0 0.0
    %1340 = vmatpush1.msra.mxu0 %v723
    %1341 = vmatprep.subr.mxu0 0.0
    %1342 = vmatpush1.msra.mxu0 %v722
    %1343 = vmatprep.subr.mxu0 0.0
    %1344 = vmatpush1.msra.mxu0 %v721
    %1345 = vmatprep.subr.mxu0 0.0
    %1346 = vmatpush1.msra.mxu0 %v720
    %1347 = vmatprep.subr.mxu0 0.0
    %1348 = vmatpush1.msra.mxu0 %v719
    %1349 = vmatprep.subr.mxu0 0.0
    %1350 = vmatpush1.msra.mxu0 %v718
    %1351 = vmatprep.subr.mxu0 0.0
    %1352 = vmatpush2.msra.mxu0 0.0
    %1353 = vmatprep.subr.mxu0 0.0
    %1354 = vmatpush2.msra.mxu0 0.0
    %1355 = vmatprep.subr.mxu0 0.0
    %1356 = vmatpush2.msra.mxu0 0.0
    %1357 = vmatprep.subr.mxu0 0.0
    %1358 = vmatpush2.msra.mxu0 0.0
    %1359 = vmatprep.subr.mxu0 0.0
    %1360 = vmatpush2.msra.mxu0 0.0
    %1361 = vmatprep.subr.mxu0 0.0
    %1362 = vmatpush2.msra.mxu0 0.0
    %1363 = vmatprep.subr.mxu0 0.0
    %1364 = vmatpush2.msra.mxu0 0.0
    %1365 = vmatprep.subr.mxu0 0.0
    %1366 = vmatpush2.msra.mxu0 0.0
    %1367 = vmatprep.subr.mxu0 0.0
    %1368 = vmatpush2.msra.mxu0 0.0
    %1369 = vmatprep.subr.mxu0 0.0
    %1370 = vmatpush2.msra.mxu0 0.0
    %1371 = vmatprep.subr.mxu0 0.0
    %1372 = vmatpush2.msra.mxu0 0.0
    %1373 = vmatprep.subr.mxu0 0.0
    %1374 = vmatpush2.msra.mxu0 0.0
    %1375 = vmatprep.subr.mxu0 0.0
    %1376 = vmatpush2.msra.mxu0 0.0
    %1377 = vmatprep.subr.mxu0 0.0
    %1378 = vmatpush2.msra.mxu0 0.0
    %1379 = vmatprep.subr.mxu0 0.0
    %1380 = vmatpush2.msra.mxu0 0.0
    %1381 = vmatprep.subr.mxu0 0.0
    %1382 = vmatpush2.msra.mxu0 0.0
    %1383 = vmatprep.mubr.f32.mxu0 0.0
    %1384 = vmatmul.mubr.f32.gmra.mxu0 %v1316
    %v1385 = vpop.f32.mrf.mxu0
    %v1386 = vadd.f32 %v1318, %v1385
    %v1387 = vpop.f32.mrf.mxu0
    %1388 = vdwg.mxu0
    %v1389 = vmax.f32 %v1386, 0.0
    %s1390 = scalar_lea.vmem [#allocation2], 56
    %v1391 = vld [vmem:[%s1390] sm:$0xff]
    %1392 = vmatprep.subr.mxu0 0.0
    %1393 = vmatpush1.msra.mxu0 %v733
    %1394 = vmatprep.subr.mxu0 0.0
    %1395 = vmatpush1.msra.mxu0 %v732
    %1396 = vmatprep.subr.mxu0 0.0
    %1397 = vmatpush1.msra.mxu0 %v731
    %1398 = vmatprep.subr.mxu0 0.0
    %1399 = vmatpush1.msra.mxu0 %v730
    %1400 = vmatprep.subr.mxu0 0.0
    %1401 = vmatpush1.msra.mxu0 %v729
    %1402 = vmatprep.subr.mxu0 0.0
    %1403 = vmatpush1.msra.mxu0 %v728
    %1404 = vmatprep.subr.mxu0 0.0
    %1405 = vmatpush1.msra.mxu0 %v727
    %1406 = vmatprep.subr.mxu0 0.0
    %1407 = vmatpush1.msra.mxu0 %v726
    %1408 = vmatprep.subr.mxu0 0.0
    %1409 = vmatpush1.msra.mxu0 %v725
    %1410 = vmatprep.subr.mxu0 0.0
    %1411 = vmatpush1.msra.mxu0 %v724
    %1412 = vmatprep.subr.mxu0 0.0
    %1413 = vmatpush1.msra.mxu0 %v723
    %1414 = vmatprep.subr.mxu0 0.0
    %1415 = vmatpush1.msra.mxu0 %v722
    %1416 = vmatprep.subr.mxu0 0.0
    %1417 = vmatpush1.msra.mxu0 %v721
    %1418 = vmatprep.subr.mxu0 0.0
    %1419 = vmatpush1.msra.mxu0 %v720
    %1420 = vmatprep.subr.mxu0 0.0
    %1421 = vmatpush1.msra.mxu0 %v719
    %1422 = vmatprep.subr.mxu0 0.0
    %1423 = vmatpush1.msra.mxu0 %v718
    %1424 = vmatprep.subr.mxu0 0.0
    %1425 = vmatpush2.msra.mxu0 0.0
    %1426 = vmatprep.subr.mxu0 0.0
    %1427 = vmatpush2.msra.mxu0 0.0
    %1428 = vmatprep.subr.mxu0 0.0
    %1429 = vmatpush2.msra.mxu0 0.0
    %1430 = vmatprep.subr.mxu0 0.0
    %1431 = vmatpush2.msra.mxu0 0.0
    %1432 = vmatprep.subr.mxu0 0.0
    %1433 = vmatpush2.msra.mxu0 0.0
    %1434 = vmatprep.subr.mxu0 0.0
    %1435 = vmatpush2.msra.mxu0 0.0
    %1436 = vmatprep.subr.mxu0 0.0
    %1437 = vmatpush2.msra.mxu0 0.0
    %1438 = vmatprep.subr.mxu0 0.0
    %1439 = vmatpush2.msra.mxu0 0.0
    %1440 = vmatprep.subr.mxu0 0.0
    %1441 = vmatpush2.msra.mxu0 0.0
    %1442 = vmatprep.subr.mxu0 0.0
    %1443 = vmatpush2.msra.mxu0 0.0
    %1444 = vmatprep.subr.mxu0 0.0
    %1445 = vmatpush2.msra.mxu0 0.0
    %1446 = vmatprep.subr.mxu0 0.0
    %1447 = vmatpush2.msra.mxu0 0.0
    %1448 = vmatprep.subr.mxu0 0.0
    %1449 = vmatpush2.msra.mxu0 0.0
    %1450 = vmatprep.subr.mxu0 0.0
    %1451 = vmatpush2.msra.mxu0 0.0
    %1452 = vmatprep.subr.mxu0 0.0
    %1453 = vmatpush2.msra.mxu0 0.0
    %1454 = vmatprep.subr.mxu0 0.0
    %1455 = vmatpush2.msra.mxu0 0.0
    %1456 = vmatprep.mubr.f32.mxu0 0.0
    %1457 = vmatmul.mubr.f32.gmra.mxu0 %v1389
    %v1458 = vpop.f32.mrf.mxu0
    %v1459 = vadd.f32 %v1391, %v1458
    %v1460 = vpop.f32.mrf.mxu0
    %1461 = vdwg.mxu0
    %v1462 = vmax.f32 %v1459, 0.0
    %1463 = vst [vmem:[%s878] sm:$0xff] %v1462
    // Predicated region
    $region54: #{tpu_custom_call.1} parent=1 // pred_check
      %p1464 = pneg %p95
    $region55: #{tpu_custom_call.1} parent=1 // pred_check_branch
      %1466 = sbr.rel (%p1464) target = $region57
    $region56: #{tpu_custom_call.1} parent=1 // pred_region
      %v1467 = vld [vmem:[#allocation13] sm:$0xff]
      %v1468 = vld [vmem:[#allocation13 + $0x8] sm:$0xff]
      %v1469 = vld [vmem:[#allocation13 + $0x10] sm:$0xff]
      %v1470 = vld [vmem:[#allocation13 + $0x18] sm:$0xff]
      %v1471 = vld [vmem:[#allocation13 + $0x20] sm:$0xff]
      %v1472 = vld [vmem:[#allocation13 + $0x28] sm:$0xff]
      %v1473 = vld [vmem:[#allocation13 + $0x30] sm:$0xff]
      %v1474 = vld [vmem:[#allocation13 + $0x38] sm:$0xff]
      %v1475 = vld [vmem:[#allocation13 + $0x40] sm:$0xff]
      %v1476 = vld [vmem:[#allocation13 + $0x48] sm:$0xff]
      %v1477 = vld [vmem:[#allocation13 + $0x50] sm:$0xff]
      %v1478 = vld [vmem:[#allocation13 + $0x58] sm:$0xff]
      %v1479 = vld [vmem:[#allocation13 + $0x60] sm:$0xff]
      %v1480 = vld [vmem:[#allocation13 + $0x68] sm:$0xff]
      %v1481 = vld [vmem:[#allocation13 + $0x70] sm:$0xff]
      %v1482 = vld [vmem:[#allocation13 + $0x78] sm:$0xff]
      %v1483 = vld [vmem:[%s6] sm:$0x1]
      %v1485 = vlaneseq
      %v1486 = vshrl.u32 %v1485, 7
      %v1487 = vsub.s32 0, %v1486
      %v1488 = vrot.slane %v1483, %v1487
      %1490 = vmatprep.subr.mxu0 0.0
      %1491 = vmatpush1.msra.mxu0 %v1482
      %1492 = vmatprep.subr.mxu0 0.0
      %1493 = vmatpush1.msra.mxu0 %v1481
      %1494 = vmatprep.subr.mxu0 0.0
      %1495 = vmatpush1.msra.mxu0 %v1480
      %1496 = vmatprep.subr.mxu0 0.0
      %1497 = vmatpush1.msra.mxu0 %v1479
      %1498 = vmatprep.subr.mxu0 0.0
      %1499 = vmatpush1.msra.mxu0 %v1478
      %1500 = vmatprep.subr.mxu0 0.0
      %1501 = vmatpush1.msra.mxu0 %v1477
      %1502 = vmatprep.subr.mxu0 0.0
      %1503 = vmatpush1.msra.mxu0 %v1476
      %1504 = vmatprep.subr.mxu0 0.0
      %1505 = vmatpush1.msra.mxu0 %v1475
      %1506 = vmatprep.subr.mxu0 0.0
      %1507 = vmatpush1.msra.mxu0 %v1474
      %1508 = vmatprep.subr.mxu0 0.0
      %1509 = vmatpush1.msra.mxu0 %v1473
      %1510 = vmatprep.subr.mxu0 0.0
      %1511 = vmatpush1.msra.mxu0 %v1472
      %1512 = vmatprep.subr.mxu0 0.0
      %1513 = vmatpush1.msra.mxu0 %v1471
      %1514 = vmatprep.subr.mxu0 0.0
      %1515 = vmatpush1.msra.mxu0 %v1470
      %1516 = vmatprep.subr.mxu0 0.0
      %1517 = vmatpush1.msra.mxu0 %v1469
      %1518 = vmatprep.subr.mxu0 0.0
      %1519 = vmatpush1.msra.mxu0 %v1468
      %1520 = vmatprep.subr.mxu0 0.0
      %1521 = vmatpush1.msra.mxu0 %v1467
      %1522 = vmatprep.subr.mxu0 0.0
      %1523 = vmatpush2.msra.mxu0 0.0
      %1524 = vmatprep.subr.mxu0 0.0
      %1525 = vmatpush2.msra.mxu0 0.0
      %1526 = vmatprep.subr.mxu0 0.0
      %1527 = vmatpush2.msra.mxu0 0.0
      %1528 = vmatprep.subr.mxu0 0.0
      %1529 = vmatpush2.msra.mxu0 0.0
      %1530 = vmatprep.subr.mxu0 0.0
      %1531 = vmatpush2.msra.mxu0 0.0
      %1532 = vmatprep.subr.mxu0 0.0
      %1533 = vmatpush2.msra.mxu0 0.0
      %1534 = vmatprep.subr.mxu0 0.0
      %1535 = vmatpush2.msra.mxu0 0.0
      %1536 = vmatprep.subr.mxu0 0.0
      %1537 = vmatpush2.msra.mxu0 0.0
      %1538 = vmatprep.subr.mxu0 0.0
      %1539 = vmatpush2.msra.mxu0 0.0
      %1540 = vmatprep.subr.mxu0 0.0
      %1541 = vmatpush2.msra.mxu0 0.0
      %1542 = vmatprep.subr.mxu0 0.0
      %1543 = vmatpush2.msra.mxu0 0.0
      %1544 = vmatprep.subr.mxu0 0.0
      %1545 = vmatpush2.msra.mxu0 0.0
      %1546 = vmatprep.subr.mxu0 0.0
      %1547 = vmatpush2.msra.mxu0 0.0
      %1548 = vmatprep.subr.mxu0 0.0
      %1549 = vmatpush2.msra.mxu0 0.0
      %1550 = vmatprep.subr.mxu0 0.0
      %1551 = vmatpush2.msra.mxu0 0.0
      %1552 = vmatprep.subr.mxu0 0.0
      %1553 = vmatpush2.msra.mxu0 0.0
      %1554 = vmatprep.mubr.f32.mxu0 0.0
      %1555 = vmatmul.mubr.f32.gmra.mxu0 %v1462
      %v1556 = vpop.f32.mrf.mxu0
      %v1557 = vadd.f32 %v1488, %v1556
      %v1558 = vpop.f32.mrf.mxu0
      %1559 = vdwg.mxu0
      %1560 = vst [vmem:[#allocation14] sm:$0xff] %v1557
    $region57: #{tpu_custom_call.1} parent=1 // pred_fallthru
      _
    // Predicated region
    $region58: #{tpu_custom_call.1} parent=1 // pred_check
      _
    $region59: #{tpu_custom_call.1} parent=1 // pred_check_branch
      %1562 = sbr.rel (0) target = $region61
    $region60: #{tpu_custom_call.1} parent=1 // pred_region
      %s1564 = ssub.s32 128, 128
      %1565 = vsyncadd [#allocation7], %s1564
      %s1567 = sshll.u32 [#allocation14], 4
      %s1568 = int_to_ptr.vmem [resolvable:$true] %s1567
      %1570 = dma.vmem_to_hbm [thread:$0]  %s1568, 128, %s7, [#allocation7]
    $region61: #{tpu_custom_call.1} parent=1 // pred_fallthru
      _
    // Predicated region
    $region62: #{tpu_custom_call.1} parent=1 // pred_check
      _
    $region63: #{tpu_custom_call.1} parent=1 // pred_check_branch
      %1572 = sbr.rel (0) target = $region65
    $region64: #{tpu_custom_call.1} parent=1 // pred_region
      %1573 = dma.done [#allocation7], 128
    $region65: #{tpu_custom_call.1} parent=1 // pred_fallthru
      _
    %1574 = vsyncpa [#allocation6], 1
    %1575 = vsyncpa [#allocation9], 1
    %1576 = vsyncpa [#allocation12], 1
    %1577 = vsyncpa [#allocation7], 1

</llo_original>
